<compile_context>
chip_gen: v7x
topology: tpu7x:2x2x1
jax: 0.10.0
libtpu: 0.0.40
codegen_flags: <defaults>
</compile_context>

<pallas_src>
import math
from functools import partial

import jax
import jax.numpy as jnp
from jax.experimental import pallas as pl
from jax.experimental.pallas import tpu as pltpu


# ------------------------ fused attention + fc_o kernel ------------------------
def _fused_ssa_kernel(q_ref, k_ref, v_ref, w_ref, b_ref, o_ref, merged_ref,
                      *, h, d_k, d_v, bt, nq):
    # q_ref: (bt, nq, d_model)   k_ref/v_ref: (bt, nk, d_model)
    # w_ref: (d_model, h*d_v) torch (out,in) layout   b_ref: (1, d_model)
    # o_ref: (bt, nq, d_model)   merged_ref: VMEM scratch (bt*nq, h*d_v) f32
    scale = 1.0 / math.sqrt(d_k)

    for b in range(bt):                               # static unroll; bt is 1 or 2
        q = q_ref[b]                                  # (nq, d_model), input dtype
        k = k_ref[b]                                  # (nk, d_model)
        v = v_ref[b]                                  # (nk, d_model)
        r0 = b * nq

        for i in range(h):                            # static unroll over heads
            qh = q[:, i * d_k:(i + 1) * d_k]          # (nq, d_k)
            kh = k[:, i * d_k:(i + 1) * d_k]          # (nk, d_k)
            vh = v[:, i * d_v:(i + 1) * d_v]          # (nk, d_v)

            # scores = qh @ kh^T : contract dim 1 of both (no explicit transpose).
            # Operands keep their input dtype (bf16 feeds the MXU natively).
            s = jax.lax.dot_general(
                qh, kh, (((1,), (1,)), ((), ())),
                preferred_element_type=jnp.float32)   # (nq, nk) f32
            s = s * scale                             # exact f32 scale on scores

            # softmax over keys, stats in f32
            s = s - jnp.max(s, axis=-1, keepdims=True)
            p = jnp.exp(s)
            denom = jnp.sum(p, axis=-1, keepdims=True)

            o_h = jnp.dot(p.astype(v.dtype), vh,
                          preferred_element_type=jnp.float32)   # (nq, d_v) f32
            o_h = o_h / denom                         # exact normalization

            # Write straight into the merged scratch slice: replaces
            # jnp.concatenate of 4-lane-wide arrays (XLU rotates + selects)
            # and keeps per-head live ranges short.
            merged_ref[r0:r0 + nq, i * d_v:(i + 1) * d_v] = o_h

    # fc_o once per grid step over all bt*nq rows:
    # merged @ W^T + b, with W in torch (out,in) layout -> contract dim 1 of both.
    merged = merged_ref[...]
    proj = jax.lax.dot_general(
        merged.astype(w_ref.dtype), w_ref[...],
        (((1,), (1,)), ((), ())),
        preferred_element_type=jnp.float32)           # (bt*nq, d_model) f32
    proj = proj + b_ref[...].astype(jnp.float32)

    o_ref[...] = proj.reshape(o_ref.shape).astype(o_ref.dtype)


# ------------------------------- module wrapper --------------------------------
def simplified_sdpa(queries, keys, values, fc_o_weight, fc_o_bias, h):
    """Forward pass of SimplifiedScaledDotProductAttention (eval mode).

    queries: (B, nq, d_model); keys/values: (B, nk, d_model)
    fc_o_weight: (d_model, h*d_v) torch layout (out_features, in_features)
    fc_o_bias:   (d_model,)
    """
    B, nq, d_model = queries.shape
    nk = keys.shape[1]
    d_k = d_model // h
    d_v = d_model // h

    # Coarse grid: 2 parallel steps when B is even (keeps both v7x TensorCores
    # fed; near-zero extra cost on single-TC v5e/v6e), otherwise 1 step.
    num_blocks = 2 if (B >= 2 and B % 2 == 0) else 1
    bt = B // num_blocks

    bias2d = fc_o_bias.reshape(1, d_model)
    kernel = partial(_fused_ssa_kernel, h=h, d_k=d_k, d_v=d_v, bt=bt, nq=nq)

    return pl.pallas_call(
        kernel,
        out_shape=jax.ShapeDtypeStruct((B, nq, d_model), queries.dtype),
        grid=(num_blocks,),
        in_specs=[
            pl.BlockSpec((bt, nq, d_model), lambda b: (b, 0, 0)),
            pl.BlockSpec((bt, nk, d_model), lambda b: (b, 0, 0)),
            pl.BlockSpec((bt, nk, d_model), lambda b: (b, 0, 0)),
            # weight / bias: same block every step -> resident in VMEM
            pl.BlockSpec((d_model, h * d_v), lambda b: (0, 0)),
            pl.BlockSpec((1, d_model), lambda b: (0, 0)),
        ],
        out_specs=pl.BlockSpec((bt, nq, d_model), lambda b: (b, 0, 0)),
        scratch_shapes=[pltpu.VMEM((bt * nq, h * d_v), jnp.float32)],
        compiler_params=pltpu.CompilerParams(
            dimension_semantics=("parallel",),        # megacore-shard over batch blocks
            vmem_limit_bytes=32 * 1024 * 1024,        # safe on v5e/v6e/v7x
        ),
    )(queries, keys, values, fc_o_weight, bias2d)


if __name__ == "__main__":
    # Small shapes consistent with the module: d_model=32, h=8 -> d_k=d_v=4.
    B, NQ, NK, D_MODEL, H = 2, 8, 8, 32, 8

    key = jax.random.PRNGKey(0)
    kq, kk, kv, kw = jax.random.split(key, 4)

    queries = jax.random.normal(kq, (B, NQ, D_MODEL), dtype=jnp.float32)
    keys_ = jax.random.normal(kk, (B, NK, D_MODEL), dtype=jnp.float32)
    values = jax.random.normal(kv, (B, NK, D_MODEL), dtype=jnp.float32)

    # init_weights(): nn.Linear -> normal(std=0.001) weights, zero bias.
    fc_o_weight = 0.001 * jax.random.normal(kw, (D_MODEL, D_MODEL), dtype=jnp.float32)
    fc_o_bias = jnp.zeros((D_MODEL,), dtype=jnp.float32)

    out = simplified_sdpa(queries, keys_, values, fc_o_weight, fc_o_bias, H)
    jax.block_until_ready(out)

    # sanity check against a pure-JAX reference of the torch module
    def ref_forward(q_in, k_in, v_in, w, b, h):
        bsz, nq, dm = q_in.shape
        nk = k_in.shape[1]
        dk = dm // h
        q = q_in.reshape(bsz, nq, h, dk).transpose(0, 2, 1, 3)
        k = k_in.reshape(bsz, nk, h, dk).transpose(0, 2, 3, 1)
        v = v_in.reshape(bsz, nk, h, dk).transpose(0, 2, 1, 3)
        att = jnp.matmul(q, k) / math.sqrt(dk)
        att = jax.nn.softmax(att, axis=-1)
        o = jnp.matmul(att, v).transpose(0, 2, 1, 3).reshape(bsz, nq, h * dk)
        return o @ w.T + b

    ref = ref_forward(queries, keys_, values, fc_o_weight, fc_o_bias, H)
    assert out.shape == (B, NQ, D_MODEL)
    # tolerance accounts for default MXU precision (bf16 passes) on both sides
    assert jnp.allclose(out, ref, atol=1e-4, rtol=1e-2), (
        float(jnp.max(jnp.abs(out - ref))))

    print("KERNEL_OK")
</pallas_src>

<mosaic_0001>
module attributes {stable_mosaic.version = 11 : i64} {
  func.func @_fused_ssa_kernel(%arg0: i32, %arg1: memref<1x8x32xf32, #tpu.memory_space<vmem>>, %arg2: memref<1x8x32xf32, #tpu.memory_space<vmem>>, %arg3: memref<1x8x32xf32, #tpu.memory_space<vmem>>, %arg4: memref<32x32xf32, #tpu.memory_space<vmem>>, %arg5: memref<1x32xf32, #tpu.memory_space<vmem>>, %arg6: memref<1x8x32xf32, #tpu.memory_space<vmem>>, %arg7: memref<8x32xf32, #tpu.memory_space<vmem>>) attributes {dimension_semantics = [#tpu.dimension_semantics<parallel>], iteration_bounds = array<i64: 2>, scalar_prefetch = 0 : i64, scratch_operands = 1 : i64, tpu.core_type = #tpu.core_type<tc>, window_params = [{transform_indices = @transform_0, window_bounds = array<i64: 1, 8, 32>}, {transform_indices = @transform_1, window_bounds = array<i64: 1, 8, 32>}, {transform_indices = @transform_2, window_bounds = array<i64: 1, 8, 32>}, {pipeline_mode = #tpu.pipeline_mode<synchronous>, transform_indices = @transform_3, window_bounds = array<i64: 32, 32>}, {pipeline_mode = #tpu.pipeline_mode<synchronous>, transform_indices = @transform_4, window_bounds = array<i64: 1, 32>}, {transform_indices = @transform_5, window_bounds = array<i64: 1, 8, 32>}]} {
    %c0 = arith.constant 0 : index
    %c0_0 = arith.constant 0 : index
    %c0_1 = arith.constant 0 : index
    %0 = vector.load %arg1[%c0, %c0_0, %c0_1] : memref<1x8x32xf32, #tpu.memory_space<vmem>>, vector<1x8x32xf32>
    %1 = vector.shape_cast %0 : vector<1x8x32xf32> to vector<8x32xf32>
    %c0_2 = arith.constant 0 : index
    %c0_3 = arith.constant 0 : index
    %c0_4 = arith.constant 0 : index
    %2 = vector.load %arg2[%c0_2, %c0_3, %c0_4] : memref<1x8x32xf32, #tpu.memory_space<vmem>>, vector<1x8x32xf32>
    %3 = vector.shape_cast %2 : vector<1x8x32xf32> to vector<8x32xf32>
    %c0_5 = arith.constant 0 : index
    %c0_6 = arith.constant 0 : index
    %c0_7 = arith.constant 0 : index
    %4 = vector.load %arg3[%c0_5, %c0_6, %c0_7] : memref<1x8x32xf32, #tpu.memory_space<vmem>>, vector<1x8x32xf32>
    %5 = vector.shape_cast %4 : vector<1x8x32xf32> to vector<8x32xf32>
    %6 = vector.extract_strided_slice %1 {offsets = [0, 0], sizes = [8, 4], strides = [1, 1]} : vector<8x32xf32> to vector<8x4xf32>
    %7 = vector.extract_strided_slice %3 {offsets = [0, 0], sizes = [8, 4], strides = [1, 1]} : vector<8x32xf32> to vector<8x4xf32>
    %8 = vector.extract_strided_slice %5 {offsets = [0, 0], sizes = [8, 4], strides = [1, 1]} : vector<8x32xf32> to vector<8x4xf32>
    %cst = arith.constant dense<0.000000e+00> : vector<8x8xf32>
    %9 = tpu.matmul %6, %7, %cst {dimension_numbers = #tpu.dot_dimension_numbers<[1], [1], [0], [0], [0, 0, 1, 0], [], []>} : vector<8x4xf32>, vector<8x4xf32>, vector<8x8xf32> -> vector<8x8xf32>
    %cst_8 = arith.constant 5.000000e-01 : f32
    %10 = vector.broadcast %cst_8 : f32 to vector<8x8xf32>
    %11 = arith.mulf %9, %10 : vector<8x8xf32>
    %cst_9 = arith.constant dense<0xFF800000> : vector<8xf32>
    %12 = vector.multi_reduction <maximumf>, %11, %cst_9 [1] : vector<8x8xf32> to vector<8xf32>
    %13 = vector.shape_cast %12 : vector<8xf32> to vector<8x1xf32>
    %14 = vector.broadcast %13 : vector<8x1xf32> to vector<8x8xf32>
    %15 = arith.subf %11, %14 : vector<8x8xf32>
    %16 = math.exp %15 : vector<8x8xf32>
    %cst_10 = arith.constant dense<0.000000e+00> : vector<8xf32>
    %17 = vector.multi_reduction <add>, %16, %cst_10 [1] : vector<8x8xf32> to vector<8xf32>
    %18 = vector.shape_cast %17 : vector<8xf32> to vector<8x1xf32>
    %cst_11 = arith.constant dense<0.000000e+00> : vector<8x4xf32>
    %19 = tpu.matmul %16, %8, %cst_11 {dimension_numbers = #tpu.dot_dimension_numbers<[1], [0], [0], [1], [0, 0, 1, 1], [], []>} : vector<8x8xf32>, vector<8x4xf32>, vector<8x4xf32> -> vector<8x4xf32>
    %20 = vector.broadcast %18 : vector<8x1xf32> to vector<8x4xf32>
    %21 = arith.divf %19, %20 : vector<8x4xf32>
    %c0_12 = arith.constant 0 : index
    %c0_13 = arith.constant 0 : index
    %22 = vector.load %arg7[%c0_12, %c0_13] : memref<8x32xf32, #tpu.memory_space<vmem>>, vector<8x4xf32>
    tpu.vector_store %arg7[%c0_12, %c0_13], %21 {strides = array<i32>} : memref<8x32xf32, #tpu.memory_space<vmem>>, vector<8x4xf32>,
    %23 = vector.extract_strided_slice %1 {offsets = [0, 4], sizes = [8, 4], strides = [1, 1]} : vector<8x32xf32> to vector<8x4xf32>
    %24 = vector.extract_strided_slice %3 {offsets = [0, 4], sizes = [8, 4], strides = [1, 1]} : vector<8x32xf32> to vector<8x4xf32>
    %25 = vector.extract_strided_slice %5 {offsets = [0, 4], sizes = [8, 4], strides = [1, 1]} : vector<8x32xf32> to vector<8x4xf32>
    %cst_14 = arith.constant dense<0.000000e+00> : vector<8x8xf32>
    %26 = tpu.matmul %23, %24, %cst_14 {dimension_numbers = #tpu.dot_dimension_numbers<[1], [1], [0], [0], [0, 0, 1, 0], [], []>} : vector<8x4xf32>, vector<8x4xf32>, vector<8x8xf32> -> vector<8x8xf32>
    %cst_15 = arith.constant 5.000000e-01 : f32
    %27 = vector.broadcast %cst_15 : f32 to vector<8x8xf32>
    %28 = arith.mulf %26, %27 : vector<8x8xf32>
    %cst_16 = arith.constant dense<0xFF800000> : vector<8xf32>
    %29 = vector.multi_reduction <maximumf>, %28, %cst_16 [1] : vector<8x8xf32> to vector<8xf32>
    %30 = vector.shape_cast %29 : vector<8xf32> to vector<8x1xf32>
    %31 = vector.broadcast %30 : vector<8x1xf32> to vector<8x8xf32>
    %32 = arith.subf %28, %31 : vector<8x8xf32>
    %33 = math.exp %32 : vector<8x8xf32>
    %cst_17 = arith.constant dense<0.000000e+00> : vector<8xf32>
    %34 = vector.multi_reduction <add>, %33, %cst_17 [1] : vector<8x8xf32> to vector<8xf32>
    %35 = vector.shape_cast %34 : vector<8xf32> to vector<8x1xf32>
    %cst_18 = arith.constant dense<0.000000e+00> : vector<8x4xf32>
    %36 = tpu.matmul %33, %25, %cst_18 {dimension_numbers = #tpu.dot_dimension_numbers<[1], [0], [0], [1], [0, 0, 1, 1], [], []>} : vector<8x8xf32>, vector<8x4xf32>, vector<8x4xf32> -> vector<8x4xf32>
    %37 = vector.broadcast %35 : vector<8x1xf32> to vector<8x4xf32>
    %38 = arith.divf %36, %37 : vector<8x4xf32>
    %c0_19 = arith.constant 0 : index
    %c4 = arith.constant 4 : index
    %39 = vector.load %arg7[%c0_19, %c4] : memref<8x32xf32, #tpu.memory_space<vmem>>, vector<8x4xf32>
    tpu.vector_store %arg7[%c0_19, %c4], %38 {strides = array<i32>} : memref<8x32xf32, #tpu.memory_space<vmem>>, vector<8x4xf32>,
    %40 = vector.extract_strided_slice %1 {offsets = [0, 8], sizes = [8, 4], strides = [1, 1]} : vector<8x32xf32> to vector<8x4xf32>
    %41 = vector.extract_strided_slice %3 {offsets = [0, 8], sizes = [8, 4], strides = [1, 1]} : vector<8x32xf32> to vector<8x4xf32>
    %42 = vector.extract_strided_slice %5 {offsets = [0, 8], sizes = [8, 4], strides = [1, 1]} : vector<8x32xf32> to vector<8x4xf32>
    %cst_20 = arith.constant dense<0.000000e+00> : vector<8x8xf32>
    %43 = tpu.matmul %40, %41, %cst_20 {dimension_numbers = #tpu.dot_dimension_numbers<[1], [1], [0], [0], [0, 0, 1, 0], [], []>} : vector<8x4xf32>, vector<8x4xf32>, vector<8x8xf32> -> vector<8x8xf32>
    %cst_21 = arith.constant 5.000000e-01 : f32
    %44 = vector.broadcast %cst_21 : f32 to vector<8x8xf32>
    %45 = arith.mulf %43, %44 : vector<8x8xf32>
    %cst_22 = arith.constant dense<0xFF800000> : vector<8xf32>
    %46 = vector.multi_reduction <maximumf>, %45, %cst_22 [1] : vector<8x8xf32> to vector<8xf32>
    %47 = vector.shape_cast %46 : vector<8xf32> to vector<8x1xf32>
    %48 = vector.broadcast %47 : vector<8x1xf32> to vector<8x8xf32>
    %49 = arith.subf %45, %48 : vector<8x8xf32>
    %50 = math.exp %49 : vector<8x8xf32>
    %cst_23 = arith.constant dense<0.000000e+00> : vector<8xf32>
    %51 = vector.multi_reduction <add>, %50, %cst_23 [1] : vector<8x8xf32> to vector<8xf32>
    %52 = vector.shape_cast %51 : vector<8xf32> to vector<8x1xf32>
    %cst_24 = arith.constant dense<0.000000e+00> : vector<8x4xf32>
    %53 = tpu.matmul %50, %42, %cst_24 {dimension_numbers = #tpu.dot_dimension_numbers<[1], [0], [0], [1], [0, 0, 1, 1], [], []>} : vector<8x8xf32>, vector<8x4xf32>, vector<8x4xf32> -> vector<8x4xf32>
    %54 = vector.broadcast %52 : vector<8x1xf32> to vector<8x4xf32>
    %55 = arith.divf %53, %54 : vector<8x4xf32>
    %c0_25 = arith.constant 0 : index
    %c8 = arith.constant 8 : index
    %56 = vector.load %arg7[%c0_25, %c8] : memref<8x32xf32, #tpu.memory_space<vmem>>, vector<8x4xf32>
    tpu.vector_store %arg7[%c0_25, %c8], %55 {strides = array<i32>} : memref<8x32xf32, #tpu.memory_space<vmem>>, vector<8x4xf32>,
    %57 = vector.extract_strided_slice %1 {offsets = [0, 12], sizes = [8, 4], strides = [1, 1]} : vector<8x32xf32> to vector<8x4xf32>
    %58 = vector.extract_strided_slice %3 {offsets = [0, 12], sizes = [8, 4], strides = [1, 1]} : vector<8x32xf32> to vector<8x4xf32>
    %59 = vector.extract_strided_slice %5 {offsets = [0, 12], sizes = [8, 4], strides = [1, 1]} : vector<8x32xf32> to vector<8x4xf32>
    %cst_26 = arith.constant dense<0.000000e+00> : vector<8x8xf32>
    %60 = tpu.matmul %57, %58, %cst_26 {dimension_numbers = #tpu.dot_dimension_numbers<[1], [1], [0], [0], [0, 0, 1, 0], [], []>} : vector<8x4xf32>, vector<8x4xf32>, vector<8x8xf32> -> vector<8x8xf32>
    %cst_27 = arith.constant 5.000000e-01 : f32
    %61 = vector.broadcast %cst_27 : f32 to vector<8x8xf32>
    %62 = arith.mulf %60, %61 : vector<8x8xf32>
    %cst_28 = arith.constant dense<0xFF800000> : vector<8xf32>
    %63 = vector.multi_reduction <maximumf>, %62, %cst_28 [1] : vector<8x8xf32> to vector<8xf32>
    %64 = vector.shape_cast %63 : vector<8xf32> to vector<8x1xf32>
    %65 = vector.broadcast %64 : vector<8x1xf32> to vector<8x8xf32>
    %66 = arith.subf %62, %65 : vector<8x8xf32>
    %67 = math.exp %66 : vector<8x8xf32>
    %cst_29 = arith.constant dense<0.000000e+00> : vector<8xf32>
    %68 = vector.multi_reduction <add>, %67, %cst_29 [1] : vector<8x8xf32> to vector<8xf32>
    %69 = vector.shape_cast %68 : vector<8xf32> to vector<8x1xf32>
    %cst_30 = arith.constant dense<0.000000e+00> : vector<8x4xf32>
    %70 = tpu.matmul %67, %59, %cst_30 {dimension_numbers = #tpu.dot_dimension_numbers<[1], [0], [0], [1], [0, 0, 1, 1], [], []>} : vector<8x8xf32>, vector<8x4xf32>, vector<8x4xf32> -> vector<8x4xf32>
    %71 = vector.broadcast %69 : vector<8x1xf32> to vector<8x4xf32>
    %72 = arith.divf %70, %71 : vector<8x4xf32>
    %c0_31 = arith.constant 0 : index
    %c12 = arith.constant 12 : index
    %73 = vector.load %arg7[%c0_31, %c12] : memref<8x32xf32, #tpu.memory_space<vmem>>, vector<8x4xf32>
    tpu.vector_store %arg7[%c0_31, %c12], %72 {strides = array<i32>} : memref<8x32xf32, #tpu.memory_space<vmem>>, vector<8x4xf32>,
    %74 = vector.extract_strided_slice %1 {offsets = [0, 16], sizes = [8, 4], strides = [1, 1]} : vector<8x32xf32> to vector<8x4xf32>
    %75 = vector.extract_strided_slice %3 {offsets = [0, 16], sizes = [8, 4], strides = [1, 1]} : vector<8x32xf32> to vector<8x4xf32>
    %76 = vector.extract_strided_slice %5 {offsets = [0, 16], sizes = [8, 4], strides = [1, 1]} : vector<8x32xf32> to vector<8x4xf32>
    %cst_32 = arith.constant dense<0.000000e+00> : vector<8x8xf32>
    %77 = tpu.matmul %74, %75, %cst_32 {dimension_numbers = #tpu.dot_dimension_numbers<[1], [1], [0], [0], [0, 0, 1, 0], [], []>} : vector<8x4xf32>, vector<8x4xf32>, vector<8x8xf32> -> vector<8x8xf32>
    %cst_33 = arith.constant 5.000000e-01 : f32
    %78 = vector.broadcast %cst_33 : f32 to vector<8x8xf32>
    %79 = arith.mulf %77, %78 : vector<8x8xf32>
    %cst_34 = arith.constant dense<0xFF800000> : vector<8xf32>
    %80 = vector.multi_reduction <maximumf>, %79, %cst_34 [1] : vector<8x8xf32> to vector<8xf32>
    %81 = vector.shape_cast %80 : vector<8xf32> to vector<8x1xf32>
    %82 = vector.broadcast %81 : vector<8x1xf32> to vector<8x8xf32>
    %83 = arith.subf %79, %82 : vector<8x8xf32>
    %84 = math.exp %83 : vector<8x8xf32>
    %cst_35 = arith.constant dense<0.000000e+00> : vector<8xf32>
    %85 = vector.multi_reduction <add>, %84, %cst_35 [1] : vector<8x8xf32> to vector<8xf32>
    %86 = vector.shape_cast %85 : vector<8xf32> to vector<8x1xf32>
    %cst_36 = arith.constant dense<0.000000e+00> : vector<8x4xf32>
    %87 = tpu.matmul %84, %76, %cst_36 {dimension_numbers = #tpu.dot_dimension_numbers<[1], [0], [0], [1], [0, 0, 1, 1], [], []>} : vector<8x8xf32>, vector<8x4xf32>, vector<8x4xf32> -> vector<8x4xf32>
    %88 = vector.broadcast %86 : vector<8x1xf32> to vector<8x4xf32>
    %89 = arith.divf %87, %88 : vector<8x4xf32>
    %c0_37 = arith.constant 0 : index
    %c16 = arith.constant 16 : index
    %90 = vector.load %arg7[%c0_37, %c16] : memref<8x32xf32, #tpu.memory_space<vmem>>, vector<8x4xf32>
    tpu.vector_store %arg7[%c0_37, %c16], %89 {strides = array<i32>} : memref<8x32xf32, #tpu.memory_space<vmem>>, vector<8x4xf32>,
    %91 = vector.extract_strided_slice %1 {offsets = [0, 20], sizes = [8, 4], strides = [1, 1]} : vector<8x32xf32> to vector<8x4xf32>
    %92 = vector.extract_strided_slice %3 {offsets = [0, 20], sizes = [8, 4], strides = [1, 1]} : vector<8x32xf32> to vector<8x4xf32>
    %93 = vector.extract_strided_slice %5 {offsets = [0, 20], sizes = [8, 4], strides = [1, 1]} : vector<8x32xf32> to vector<8x4xf32>
    %cst_38 = arith.constant dense<0.000000e+00> : vector<8x8xf32>
    %94 = tpu.matmul %91, %92, %cst_38 {dimension_numbers = #tpu.dot_dimension_numbers<[1], [1], [0], [0], [0, 0, 1, 0], [], []>} : vector<8x4xf32>, vector<8x4xf32>, vector<8x8xf32> -> vector<8x8xf32>
    %cst_39 = arith.constant 5.000000e-01 : f32
    %95 = vector.broadcast %cst_39 : f32 to vector<8x8xf32>
    %96 = arith.mulf %94, %95 : vector<8x8xf32>
    %cst_40 = arith.constant dense<0xFF800000> : vector<8xf32>
    %97 = vector.multi_reduction <maximumf>, %96, %cst_40 [1] : vector<8x8xf32> to vector<8xf32>
    %98 = vector.shape_cast %97 : vector<8xf32> to vector<8x1xf32>
    %99 = vector.broadcast %98 : vector<8x1xf32> to vector<8x8xf32>
    %100 = arith.subf %96, %99 : vector<8x8xf32>
    %101 = math.exp %100 : vector<8x8xf32>
    %cst_41 = arith.constant dense<0.000000e+00> : vector<8xf32>
    %102 = vector.multi_reduction <add>, %101, %cst_41 [1] : vector<8x8xf32> to vector<8xf32>
    %103 = vector.shape_cast %102 : vector<8xf32> to vector<8x1xf32>
    %cst_42 = arith.constant dense<0.000000e+00> : vector<8x4xf32>
    %104 = tpu.matmul %101, %93, %cst_42 {dimension_numbers = #tpu.dot_dimension_numbers<[1], [0], [0], [1], [0, 0, 1, 1], [], []>} : vector<8x8xf32>, vector<8x4xf32>, vector<8x4xf32> -> vector<8x4xf32>
    %105 = vector.broadcast %103 : vector<8x1xf32> to vector<8x4xf32>
    %106 = arith.divf %104, %105 : vector<8x4xf32>
    %c0_43 = arith.constant 0 : index
    %c20 = arith.constant 20 : index
    %107 = vector.load %arg7[%c0_43, %c20] : memref<8x32xf32, #tpu.memory_space<vmem>>, vector<8x4xf32>
    tpu.vector_store %arg7[%c0_43, %c20], %106 {strides = array<i32>} : memref<8x32xf32, #tpu.memory_space<vmem>>, vector<8x4xf32>,
    %108 = vector.extract_strided_slice %1 {offsets = [0, 24], sizes = [8, 4], strides = [1, 1]} : vector<8x32xf32> to vector<8x4xf32>
    %109 = vector.extract_strided_slice %3 {offsets = [0, 24], sizes = [8, 4], strides = [1, 1]} : vector<8x32xf32> to vector<8x4xf32>
    %110 = vector.extract_strided_slice %5 {offsets = [0, 24], sizes = [8, 4], strides = [1, 1]} : vector<8x32xf32> to vector<8x4xf32>
    %cst_44 = arith.constant dense<0.000000e+00> : vector<8x8xf32>
    %111 = tpu.matmul %108, %109, %cst_44 {dimension_numbers = #tpu.dot_dimension_numbers<[1], [1], [0], [0], [0, 0, 1, 0], [], []>} : vector<8x4xf32>, vector<8x4xf32>, vector<8x8xf32> -> vector<8x8xf32>
    %cst_45 = arith.constant 5.000000e-01 : f32
    %112 = vector.broadcast %cst_45 : f32 to vector<8x8xf32>
    %113 = arith.mulf %111, %112 : vector<8x8xf32>
    %cst_46 = arith.constant dense<0xFF800000> : vector<8xf32>
    %114 = vector.multi_reduction <maximumf>, %113, %cst_46 [1] : vector<8x8xf32> to vector<8xf32>
    %115 = vector.shape_cast %114 : vector<8xf32> to vector<8x1xf32>
    %116 = vector.broadcast %115 : vector<8x1xf32> to vector<8x8xf32>
    %117 = arith.subf %113, %116 : vector<8x8xf32>
    %118 = math.exp %117 : vector<8x8xf32>
    %cst_47 = arith.constant dense<0.000000e+00> : vector<8xf32>
    %119 = vector.multi_reduction <add>, %118, %cst_47 [1] : vector<8x8xf32> to vector<8xf32>
    %120 = vector.shape_cast %119 : vector<8xf32> to vector<8x1xf32>
    %cst_48 = arith.constant dense<0.000000e+00> : vector<8x4xf32>
    %121 = tpu.matmul %118, %110, %cst_48 {dimension_numbers = #tpu.dot_dimension_numbers<[1], [0], [0], [1], [0, 0, 1, 1], [], []>} : vector<8x8xf32>, vector<8x4xf32>, vector<8x4xf32> -> vector<8x4xf32>
    %122 = vector.broadcast %120 : vector<8x1xf32> to vector<8x4xf32>
    %123 = arith.divf %121, %122 : vector<8x4xf32>
    %c0_49 = arith.constant 0 : index
    %c24 = arith.constant 24 : index
    %124 = vector.load %arg7[%c0_49, %c24] : memref<8x32xf32, #tpu.memory_space<vmem>>, vector<8x4xf32>
    tpu.vector_store %arg7[%c0_49, %c24], %123 {strides = array<i32>} : memref<8x32xf32, #tpu.memory_space<vmem>>, vector<8x4xf32>,
    %125 = vector.extract_strided_slice %1 {offsets = [0, 28], sizes = [8, 4], strides = [1, 1]} : vector<8x32xf32> to vector<8x4xf32>
    %126 = vector.extract_strided_slice %3 {offsets = [0, 28], sizes = [8, 4], strides = [1, 1]} : vector<8x32xf32> to vector<8x4xf32>
    %127 = vector.extract_strided_slice %5 {offsets = [0, 28], sizes = [8, 4], strides = [1, 1]} : vector<8x32xf32> to vector<8x4xf32>
    %cst_50 = arith.constant dense<0.000000e+00> : vector<8x8xf32>
    %128 = tpu.matmul %125, %126, %cst_50 {dimension_numbers = #tpu.dot_dimension_numbers<[1], [1], [0], [0], [0, 0, 1, 0], [], []>} : vector<8x4xf32>, vector<8x4xf32>, vector<8x8xf32> -> vector<8x8xf32>
    %cst_51 = arith.constant 5.000000e-01 : f32
    %129 = vector.broadcast %cst_51 : f32 to vector<8x8xf32>
    %130 = arith.mulf %128, %129 : vector<8x8xf32>
    %cst_52 = arith.constant dense<0xFF800000> : vector<8xf32>
    %131 = vector.multi_reduction <maximumf>, %130, %cst_52 [1] : vector<8x8xf32> to vector<8xf32>
    %132 = vector.shape_cast %131 : vector<8xf32> to vector<8x1xf32>
    %133 = vector.broadcast %132 : vector<8x1xf32> to vector<8x8xf32>
    %134 = arith.subf %130, %133 : vector<8x8xf32>
    %135 = math.exp %134 : vector<8x8xf32>
    %cst_53 = arith.constant dense<0.000000e+00> : vector<8xf32>
    %136 = vector.multi_reduction <add>, %135, %cst_53 [1] : vector<8x8xf32> to vector<8xf32>
    %137 = vector.shape_cast %136 : vector<8xf32> to vector<8x1xf32>
    %cst_54 = arith.constant dense<0.000000e+00> : vector<8x4xf32>
    %138 = tpu.matmul %135, %127, %cst_54 {dimension_numbers = #tpu.dot_dimension_numbers<[1], [0], [0], [1], [0, 0, 1, 1], [], []>} : vector<8x8xf32>, vector<8x4xf32>, vector<8x4xf32> -> vector<8x4xf32>
    %139 = vector.broadcast %137 : vector<8x1xf32> to vector<8x4xf32>
    %140 = arith.divf %138, %139 : vector<8x4xf32>
    %c0_55 = arith.constant 0 : index
    %c28 = arith.constant 28 : index
    %141 = vector.load %arg7[%c0_55, %c28] : memref<8x32xf32, #tpu.memory_space<vmem>>, vector<8x4xf32>
    tpu.vector_store %arg7[%c0_55, %c28], %140 {strides = array<i32>} : memref<8x32xf32, #tpu.memory_space<vmem>>, vector<8x4xf32>,
    %c0_56 = arith.constant 0 : index
    %c0_57 = arith.constant 0 : index
    %142 = vector.load %arg7[%c0_56, %c0_57] : memref<8x32xf32, #tpu.memory_space<vmem>>, vector<8x32xf32>
    %c0_58 = arith.constant 0 : index
    %c0_59 = arith.constant 0 : index
    %143 = vector.load %arg4[%c0_58, %c0_59] : memref<32x32xf32, #tpu.memory_space<vmem>>, vector<32x32xf32>
    %cst_60 = arith.constant dense<0.000000e+00> : vector<8x32xf32>
    %144 = tpu.matmul %142, %143, %cst_60 {dimension_numbers = #tpu.dot_dimension_numbers<[1], [1], [0], [0], [0, 0, 1, 0], [], []>} : vector<8x32xf32>, vector<32x32xf32>, vector<8x32xf32> -> vector<8x32xf32>
    %c0_61 = arith.constant 0 : index
    %c0_62 = arith.constant 0 : index
    %145 = vector.load %arg5[%c0_61, %c0_62] : memref<1x32xf32, #tpu.memory_space<vmem>>, vector<1x32xf32>
    %146 = vector.broadcast %145 : vector<1x32xf32> to vector<8x32xf32>
    %147 = arith.addf %144, %146 : vector<8x32xf32>
    %148 = vector.shape_cast %147 : vector<8x32xf32> to vector<1x8x32xf32>
    %c0_63 = arith.constant 0 : index
    %c0_64 = arith.constant 0 : index
    %c0_65 = arith.constant 0 : index
    %149 = vector.load %arg6[%c0_63, %c0_64, %c0_65] : memref<1x8x32xf32, #tpu.memory_space<vmem>>, vector<1x8x32xf32>
    tpu.vector_store %arg6[%c0_63, %c0_64, %c0_65], %148 {strides = array<i32>} : memref<1x8x32xf32, #tpu.memory_space<vmem>>, vector<1x8x32xf32>,
    return
  }
  func.func @transform_0(%arg0: i32) -> (i32, i32, i32) {
    %c0_i32 = arith.constant 0 : i32
    %c0_i32_0 = arith.constant 0 : i32
    %c0_i32_1 = arith.constant 0 : i32
    return %arg0, %c0_i32, %c0_i32_0 : i32, i32, i32
  }
  func.func @transform_1(%arg0: i32) -> (i32, i32, i32) {
    %c0_i32 = arith.constant 0 : i32
    %c0_i32_0 = arith.constant 0 : i32
    %c0_i32_1 = arith.constant 0 : i32
    return %arg0, %c0_i32, %c0_i32_0 : i32, i32, i32
  }
  func.func @transform_2(%arg0: i32) -> (i32, i32, i32) {
    %c0_i32 = arith.constant 0 : i32
    %c0_i32_0 = arith.constant 0 : i32
    %c0_i32_1 = arith.constant 0 : i32
    return %arg0, %c0_i32, %c0_i32_0 : i32, i32, i32
  }
  func.func @transform_3(%arg0: i32) -> (i32, i32) {
    %c0_i32 = arith.constant 0 : i32
    %c0_i32_0 = arith.constant 0 : i32
    %c0_i32_1 = arith.constant 0 : i32
    return %c0_i32, %c0_i32_0 : i32, i32
  }
  func.func @transform_4(%arg0: i32) -> (i32, i32) {
    %c0_i32 = arith.constant 0 : i32
    %c0_i32_0 = arith.constant 0 : i32
    %c0_i32_1 = arith.constant 0 : i32
    return %c0_i32, %c0_i32_0 : i32, i32
  }
  func.func @transform_5(%arg0: i32) -> (i32, i32, i32) {
    %c0_i32 = arith.constant 0 : i32
    %c0_i32_0 = arith.constant 0 : i32
    %c0_i32_1 = arith.constant 0 : i32
    return %arg0, %c0_i32, %c0_i32_0 : i32, i32, i32
  }
}

</mosaic_0001>

<llo_original>
// kernel: tpu_custom_call.1
$region0: #{tpu_custom_call.1}
  #allocation0 [shape = 'u32[]', space=smem, size = 0x4, offset = 0x4, fixed_abs, tag = 'smem constant byte address 0x4 - core index']
  #allocation1 [shape = 'u32[144,128]{1,0:T(1,128)}', space=vmem, size = 0x12000, scoped, tag = 'internal scratch']
  #allocation2 [shape = 'f32[8,32]{1,0:T(8,128)}', space=vmem, size = 0x1000, scoped, tag = 'scratch operand']
  %s0 = inlined_call_operand.hbm [shape: f32[2,8,32], index: 0, kind: input, shape index: {}]
  %s1 = inlined_call_operand.hbm [shape: f32[2,8,32], index: 1, kind: input, shape index: {}]
  %s2 = inlined_call_operand.hbm [shape: f32[2,8,32], index: 2, kind: input, shape index: {}]
  %s3 = inlined_call_operand.hbm [shape: f32[32,32], index: 3, kind: input, shape index: {}]
  %s4 = inlined_call_operand.vmem [shape: f32[1,32], index: 4, kind: input, shape index: {}]
  %s5 = inlined_call_operand.hbm [shape: f32[2,8,32], index: 5, kind: output, shape index: {}]
  %s6 = sld [smem:[#allocation0]]
  $region69: #{tpu_custom_call.1} parent=0
    _
  %s8 = ssub.s32 1, %s6
  %s9 = scalar_select 0, %s8, %s6
  $region1: #{tpu_custom_call.1} parent=0
    #allocation3 [shape = 'u8[8192]{0}', space=vmem, size = 0x2000, scoped, tag = 'input window, operand 0']
    #allocation4 [shape = 's32[2]{0}', space=sflag, size = 0x8, scoped, tag = 'scoped memory for tpu_custom_call.1']
    #allocation5 [shape = 's32[2]{0}', space=sflag, size = 0x8, scoped, tag = 'scoped memory for tpu_custom_call.1']
    #allocation6 [shape = 'u8[8192]{0}', space=vmem, size = 0x2000, scoped, tag = 'input window, operand 1']
    #allocation7 [shape = 's32[2]{0}', space=sflag, size = 0x8, scoped, tag = 'scoped memory for tpu_custom_call.1']
    #allocation8 [shape = 'u8[8192]{0}', space=vmem, size = 0x2000, scoped, tag = 'input window, operand 2']
    #allocation9 [shape = 'u8[16384]{0}', space=vmem, size = 0x4000, scoped, tag = 'input window, operand 3, single buffered']
    #allocation10 [shape = 's32[1]{0}', space=sflag, size = 0x4, scoped, tag = 'scoped memory for tpu_custom_call.1']
    #allocation11 [shape = 'u8[8192]{0}', space=vmem, size = 0x2000, scoped, tag = 'output window, operand 0']
    %10 = vsyncpa [#allocation4], 0
    %s11 = scalar_lea.sflag [#allocation4], 1
    %12 = vsyncpa %s11, 0
    %13 = vsyncpa [#allocation7], 0
    %s14 = scalar_lea.sflag [#allocation7], 1
    %15 = vsyncpa %s14, 0
    %16 = vsyncpa [#allocation10], 0
    %17 = vsyncpa [#allocation5], 0
    %s18 = scalar_lea.sflag [#allocation5], 1
    %19 = vsyncpa %s18, 0
    loop: start=0, step=1, limit=4
    $region2: #{tpu_custom_call.1} parent=1 // loop_pre_header
      _
    $region3: #{tpu_custom_call.1} parent=1 // loop_header
      %s21 = sphi 0, %s25
      %p22 = scmp.ge.s32.totalorder %s21, 4
      %s31 = sphi 0, %s33
      %s34 = sphi 0, %s31
      %s35 = sphi 0, %s34
      %s51 = sphi 0, %s35
      %s57 = sphi 0, %s59
      %s60 = sphi 0, %s57
      %s61 = sphi 0, %s60
      %s77 = sphi 0, %s61
      %s83 = sphi 0, %s85
      %s86 = sphi 0, %s83
      %s87 = sphi 0, %s86
      %s103 = sphi 0, %s87
      %s107 = sphi 0, %s107
      %s109 = sphi 0, %s107
      %s110 = sphi 0, %s109
      %s124 = sphi 0, %s110
      %s128 = sphi 0, %s128
      %s130 = sphi 0, %s128
      %s131 = sphi 0, %s130
      %s145 = sphi 0, %s131
      %s151 = sphi 0, %s153
      %s154 = sphi 0, %s151
      %s155 = sphi 0, %s154
      %s171 = sphi 0, %s155
    $region4: #{tpu_custom_call.1} parent=1 // loop_header_branch
      %24 = sbr.rel (%p22) target = $region8
    $region5: #{tpu_custom_call.1} parent=1 // loop_body
      %s26 = ssub.s32 %s21, 1
      %s27 = ssub.s32 %s21, 2
      %s28 = sadd.s32 %s21, 1
      %s29 = ssub.s32 %s21, %s28
      %p30 = scmp.eq.s32.totalorder %s29, 0
      %s32 = sadd.s32 %s31, 1
      %s33 = scalar_select %p30, %s31, %s32
      %p36 = pneg %p30
      %p37 = scmp.eq.s32.totalorder %s21, 1
      %p38 = por %p36, %p37
      %p39 = scmp.ne.s32.totalorder %s31, %s34
      %p40 = scmp.eq.s32.totalorder %s21, 0
      %p41 = por %p39, %p40
      %p42 = scmp.ne.s32.totalorder %s31, %s34
      %p43 = scmp.eq.s32.totalorder %s26, 1
      %p44 = por %p42, %p43
      %p45 = scmp.ne.s32.totalorder %s34, %s35
      %p46 = scmp.eq.s32.totalorder %s26, 0
      %p47 = por %p45, %p46
      %p48 = scmp.ne.s32.totalorder %s34, %s35
      %p49 = scmp.eq.s32.totalorder %s27, 1
      %p50 = por %p48, %p49
      %p52 = scmp.ne.s32.totalorder %s35, %s51
      %p53 = scmp.eq.s32.totalorder %s27, 0
      %p54 = por %p52, %p53
      %s55 = ssub.s32 %s21, %s28
      %p56 = scmp.eq.s32.totalorder %s55, 0
      %s58 = sadd.s32 %s57, 1
      %s59 = scalar_select %p56, %s57, %s58
      %p62 = pneg %p56
      %p63 = scmp.eq.s32.totalorder %s21, 1
      %p64 = por %p62, %p63
      %p65 = scmp.ne.s32.totalorder %s57, %s60
      %p66 = scmp.eq.s32.totalorder %s21, 0
      %p67 = por %p65, %p66
      %p68 = scmp.ne.s32.totalorder %s57, %s60
      %p69 = scmp.eq.s32.totalorder %s26, 1
      %p70 = por %p68, %p69
      %p71 = scmp.ne.s32.totalorder %s60, %s61
      %p72 = scmp.eq.s32.totalorder %s26, 0
      %p73 = por %p71, %p72
      %p74 = scmp.ne.s32.totalorder %s60, %s61
      %p75 = scmp.eq.s32.totalorder %s27, 1
      %p76 = por %p74, %p75
      %p78 = scmp.ne.s32.totalorder %s61, %s77
      %p79 = scmp.eq.s32.totalorder %s27, 0
      %p80 = por %p78, %p79
      %s81 = ssub.s32 %s21, %s28
      %p82 = scmp.eq.s32.totalorder %s81, 0
      %s84 = sadd.s32 %s83, 1
      %s85 = scalar_select %p82, %s83, %s84
      %p88 = pneg %p82
      %p89 = scmp.eq.s32.totalorder %s21, 1
      %p90 = por %p88, %p89
      %p91 = scmp.ne.s32.totalorder %s83, %s86
      %p92 = scmp.eq.s32.totalorder %s21, 0
      %p93 = por %p91, %p92
      %p94 = scmp.ne.s32.totalorder %s83, %s86
      %p95 = scmp.eq.s32.totalorder %s26, 1
      %p96 = por %p94, %p95
      %p97 = scmp.ne.s32.totalorder %s86, %s87
      %p98 = scmp.eq.s32.totalorder %s26, 0
      %p99 = por %p97, %p98
      %p100 = scmp.ne.s32.totalorder %s86, %s87
      %p101 = scmp.eq.s32.totalorder %s27, 1
      %p102 = por %p100, %p101
      %p104 = scmp.ne.s32.totalorder %s87, %s103
      %p105 = scmp.eq.s32.totalorder %s27, 0
      %p106 = por %p104, %p105
      %s108 = sadd.s32 %s107, 1
      %p111 = scmp.eq.s32.totalorder %s21, 1
      %p112 = scmp.ne.s32.totalorder %s107, %s109
      %p113 = scmp.eq.s32.totalorder %s21, 0
      %p114 = por %p112, %p113
      %p115 = scmp.ne.s32.totalorder %s107, %s109
      %p116 = scmp.eq.s32.totalorder %s26, 1
      %p117 = por %p115, %p116
      %p118 = scmp.ne.s32.totalorder %s109, %s110
      %p119 = scmp.eq.s32.totalorder %s26, 0
      %p120 = por %p118, %p119
      %p121 = scmp.ne.s32.totalorder %s109, %s110
      %p122 = scmp.eq.s32.totalorder %s27, 1
      %p123 = por %p121, %p122
      %p125 = scmp.ne.s32.totalorder %s110, %s124
      %p126 = scmp.eq.s32.totalorder %s27, 0
      %p127 = por %p125, %p126
      %s129 = sadd.s32 %s128, 1
      %p132 = scmp.eq.s32.totalorder %s21, 1
      %p133 = scmp.ne.s32.totalorder %s128, %s130
      %p134 = scmp.eq.s32.totalorder %s21, 0
      %p135 = por %p133, %p134
      %p136 = scmp.ne.s32.totalorder %s128, %s130
      %p137 = scmp.eq.s32.totalorder %s26, 1
      %p138 = por %p136, %p137
      %p139 = scmp.ne.s32.totalorder %s130, %s131
      %p140 = scmp.eq.s32.totalorder %s26, 0
      %p141 = por %p139, %p140
      %p142 = scmp.ne.s32.totalorder %s130, %s131
      %p143 = scmp.eq.s32.totalorder %s27, 1
      %p144 = por %p142, %p143
      %p146 = scmp.ne.s32.totalorder %s131, %s145
      %p147 = scmp.eq.s32.totalorder %s27, 0
      %p148 = por %p146, %p147
      %s149 = ssub.s32 %s21, %s28
      %p150 = scmp.eq.s32.totalorder %s149, 0
      %s152 = sadd.s32 %s151, 1
      %s153 = scalar_select %p150, %s151, %s152
      %p156 = pneg %p150
      %p157 = scmp.eq.s32.totalorder %s21, 1
      %p158 = por %p156, %p157
      %p159 = scmp.ne.s32.totalorder %s151, %s154
      %p160 = scmp.eq.s32.totalorder %s21, 0
      %p161 = por %p159, %p160
      %p162 = scmp.ne.s32.totalorder %s151, %s154
      %p163 = scmp.eq.s32.totalorder %s26, 1
      %p164 = por %p162, %p163
      %p165 = scmp.ne.s32.totalorder %s154, %s155
      %p166 = scmp.eq.s32.totalorder %s26, 0
      %p167 = por %p165, %p166
      %p168 = scmp.ne.s32.totalorder %s154, %s155
      %p169 = scmp.eq.s32.totalorder %s27, 1
      %p170 = por %p168, %p169
      %p172 = scmp.ne.s32.totalorder %s155, %s171
      %p173 = scmp.eq.s32.totalorder %s27, 0
      %p174 = por %p172, %p173
      %p175 = scmp.le.s32.totalorder 1, %s21
      %p176 = scmp.lt.s32.totalorder %s21, 3
      %p177 = pnand %p175, %p176
      %p178 = pneg %p177
      // Predicated region
      $region9: #{tpu_custom_call.1} parent=5 // pred_check
        _
      $region10: #{tpu_custom_call.1} parent=5 // pred_check_branch
        %180 = sbr.rel (%p177) target = $region12
      $region11: #{tpu_custom_call.1} parent=5 // pred_region
        %s181 = ssub.s32 %s21, 1
        // Predicated region
        $region13: #{tpu_custom_call.1} parent=11 // pred_check
          %p182 = pneg %p120
        $region14: #{tpu_custom_call.1} parent=11 // pred_check_branch
          %184 = sbr.rel (%p182) target = $region16
        $region15: #{tpu_custom_call.1} parent=11 // pred_region
          %s186 = ssub.s32 512, 512
          %187 = vsyncadd [#allocation10], %s186
          %s188 = sshll.u32 [#allocation9], 4
          %s189 = int_to_ptr.vmem [resolvable:$true] %s188
          %194 = dma.hbm_to_vmem [thread:$0]  %s3, 512, %s189, [#allocation10], 128, 128, 8
        $region16: #{tpu_custom_call.1} parent=11 // pred_fallthru
          _
        // Predicated region
        $region17: #{tpu_custom_call.1} parent=11 // pred_check
          %p195 = pneg %p141
        $region18: #{tpu_custom_call.1} parent=11 // pred_check_branch
          %197 = sbr.rel (%p195) target = $region20
        $region19: #{tpu_custom_call.1} parent=11 // pred_region
          _
        $region20: #{tpu_custom_call.1} parent=11 // pred_fallthru
          _
      $region12: #{tpu_custom_call.1} parent=5 // pred_fallthru
        _
      %p198 = scmp.lt.s32.totalorder %s21, 2
      // Predicated region
      $region21: #{tpu_custom_call.1} parent=5 // pred_check
        %p199 = pneg %p198
      $region22: #{tpu_custom_call.1} parent=5 // pred_check_branch
        %201 = sbr.rel (%p199) target = $region24
      $region23: #{tpu_custom_call.1} parent=5 // pred_region
        // Predicated region
        $region25: #{tpu_custom_call.1} parent=23 // pred_check
          %p202 = pneg %p41
        $region26: #{tpu_custom_call.1} parent=23 // pred_check_branch
          %204 = sbr.rel (%p202) target = $region28
        $region27: #{tpu_custom_call.1} parent=23 // pred_region
          %s205 = sand.u32 %s31, 1
          %s206 = scalar_lea.sflag [#allocation4], %s205
          %s207 = sand.u32 %s31, 1
          %s208 = smul.addr %s207, 8
          %s209 = scalar_lea.vmem [#allocation3], %s208
          %s211 = ssub.s32 128, 128
          %212 = vsyncadd %s206, %s211
          %s213 = smul.addr %s21, 128
          %s214 = scalar_lea.hbm %s0, %s213
          %s216 = sshll.u32 %s209, 4
          %s217 = int_to_ptr.vmem [resolvable:$true] %s216
          %219 = dma.hbm_to_vmem [thread:$0]  %s214, 128, %s217, %s206
        $region28: #{tpu_custom_call.1} parent=23 // pred_fallthru
          _
        // Predicated region
        $region29: #{tpu_custom_call.1} parent=23 // pred_check
          %p220 = pneg %p67
        $region30: #{tpu_custom_call.1} parent=23 // pred_check_branch
          %222 = sbr.rel (%p220) target = $region32
        $region31: #{tpu_custom_call.1} parent=23 // pred_region
          %s223 = sand.u32 %s21, 1
          %s224 = scalar_lea.sflag [#allocation7], %s223
          %s225 = sand.u32 %s57, 1
          %s226 = smul.addr %s225, 8
          %s227 = scalar_lea.vmem [#allocation6], %s226
          %s229 = ssub.s32 128, 128
          %230 = vsyncadd %s224, %s229
          %s231 = smul.addr %s21, 128
          %s232 = scalar_lea.hbm %s1, %s231
          %s234 = sshll.u32 %s227, 4
          %s235 = int_to_ptr.vmem [resolvable:$true] %s234
          %237 = dma.hbm_to_vmem [thread:$0]  %s232, 128, %s235, %s224
        $region32: #{tpu_custom_call.1} parent=23 // pred_fallthru
          _
        // Predicated region
        $region33: #{tpu_custom_call.1} parent=23 // pred_check
          %p238 = pneg %p93
        $region34: #{tpu_custom_call.1} parent=23 // pred_check_branch
          %240 = sbr.rel (%p238) target = $region36
        $region35: #{tpu_custom_call.1} parent=23 // pred_region
          %s241 = sand.u32 %s21, 1
          %s242 = scalar_lea.sflag [#allocation7], %s241
          %s243 = sand.u32 %s83, 1
          %s244 = smul.addr %s243, 8
          %s245 = scalar_lea.vmem [#allocation8], %s244
          %s247 = ssub.s32 128, 128
          %248 = vsyncadd %s242, %s247
          %s249 = smul.addr %s21, 128
          %s250 = scalar_lea.hbm %s2, %s249
          %s252 = sshll.u32 %s245, 4
          %s253 = int_to_ptr.vmem [resolvable:$true] %s252
          %255 = dma.hbm_to_vmem [thread:$0]  %s250, 128, %s253, %s242
        $region36: #{tpu_custom_call.1} parent=23 // pred_fallthru
          _
      $region24: #{tpu_custom_call.1} parent=5 // pred_fallthru
        _
      %p256 = scmp.le.s32.totalorder 1, %s21
      %p257 = scmp.lt.s32.totalorder %s21, 3
      %p258 = pnand %p256, %p257
      %p259 = pneg %p258
      // Predicated region
      $region37: #{tpu_custom_call.1} parent=5 // pred_check
        _
      $region38: #{tpu_custom_call.1} parent=5 // pred_check_branch
        %261 = sbr.rel (%p258) target = $region40
      $region39: #{tpu_custom_call.1} parent=5 // pred_region
        %s262 = ssub.s32 %s21, 1
        %s263 = sand.u32 %s34, 1
        %s264 = scalar_lea.sflag [#allocation4], %s263
        %s265 = sand.u32 %s34, 1
        %s266 = smul.addr %s265, 8
        %s267 = scalar_lea.vmem [#allocation3], %s266
        // Predicated region
        $region41: #{tpu_custom_call.1} parent=39 // pred_check
          %p268 = pneg %p47
        $region42: #{tpu_custom_call.1} parent=39 // pred_check_branch
          %270 = sbr.rel (%p268) target = $region44
        $region43: #{tpu_custom_call.1} parent=39 // pred_region
          %271 = dma.done %s264, 128
        $region44: #{tpu_custom_call.1} parent=39 // pred_fallthru
          _
        %s272 = sand.u32 %s26, 1
        %s273 = scalar_lea.sflag [#allocation7], %s272
        %s274 = sand.u32 %s60, 1
        %s275 = smul.addr %s274, 8
        %s276 = scalar_lea.vmem [#allocation6], %s275
        // Predicated region
        $region45: #{tpu_custom_call.1} parent=39 // pred_check
          %p277 = pneg %p73
        $region46: #{tpu_custom_call.1} parent=39 // pred_check_branch
          %279 = sbr.rel (%p277) target = $region48
        $region47: #{tpu_custom_call.1} parent=39 // pred_region
          %280 = dma.done %s273, 128
        $region48: #{tpu_custom_call.1} parent=39 // pred_fallthru
          _
        %s281 = sand.u32 %s26, 1
        %s282 = scalar_lea.sflag [#allocation7], %s281
        %s283 = sand.u32 %s86, 1
        %s284 = smul.addr %s283, 8
        %s285 = scalar_lea.vmem [#allocation8], %s284
        // Predicated region
        $region49: #{tpu_custom_call.1} parent=39 // pred_check
          %p286 = pneg %p99
        $region50: #{tpu_custom_call.1} parent=39 // pred_check_branch
          %288 = sbr.rel (%p286) target = $region52
        $region51: #{tpu_custom_call.1} parent=39 // pred_region
          %289 = dma.done %s282, 128
        $region52: #{tpu_custom_call.1} parent=39 // pred_fallthru
          _
        // Predicated region
        $region53: #{tpu_custom_call.1} parent=39 // pred_check
          %p290 = pneg %p120
        $region54: #{tpu_custom_call.1} parent=39 // pred_check_branch
          %292 = sbr.rel (%p290) target = $region56
        $region55: #{tpu_custom_call.1} parent=39 // pred_region
          %293 = dma.done [#allocation10], 512
        $region56: #{tpu_custom_call.1} parent=39 // pred_fallthru
          _
        %s294 = sand.u32 %s34, 1
        %s295 = scalar_lea.sflag [#allocation4], %s294
        %s296 = sand.u32 %s34, 1
        %s297 = smul.addr %s296, 8
        %s298 = scalar_lea.vmem [#allocation3], %s297
        %p299 = pneg %p47
        %p300 = pneg %p44
        %s301 = sand.u32 %s26, 1
        %s302 = scalar_lea.sflag [#allocation7], %s301
        %s303 = sand.u32 %s60, 1
        %s304 = smul.addr %s303, 8
        %s305 = scalar_lea.vmem [#allocation6], %s304
        %p306 = pneg %p73
        %p307 = pneg %p70
        %s308 = sand.u32 %s26, 1
        %s309 = scalar_lea.sflag [#allocation7], %s308
        %s310 = sand.u32 %s86, 1
        %s311 = smul.addr %s310, 8
        %s312 = scalar_lea.vmem [#allocation8], %s311
        %p313 = pneg %p99
        %p314 = pneg %p96
        %p315 = pneg %p120
        %p316 = pneg %p117
        %p317 = pneg %p141
        %p318 = pneg %p138
        %p319 = pneg %p167
        %p320 = pneg %p164
        %s321 = sand.u32 %s154, 1
        %s322 = scalar_lea.sflag [#allocation5], %s321
        %s323 = sand.u32 %s154, 1
        %s324 = smul.addr %s323, 8
        %s325 = scalar_lea.vmem [#allocation11], %s324
        %v326 = vld [vmem:[%s267] sm:$0xff]
        %v327 = vld [vmem:[%s276] sm:$0xff]
        %v328 = vld [vmem:[%s285] sm:$0xff]
        %vm329 = vcmask 31744
        %v331 = vsel %vm329, %v326, 0
        %v334 = vsel %vm329, %v327, 0
        %336 = vmatprep.subr.mxu0 0.0
        %337 = vmatpush1.xpose.msra.mxu0 %v334
        %338 = vmatprep.subr.mxu0 0.0
        %339 = vmatpush1.xpose.msra.mxu0 0.0
        %340 = vmatprep.subr.mxu0 0.0
        %341 = vmatpush1.xpose.msra.mxu0 0.0
        %342 = vmatprep.subr.mxu0 0.0
        %343 = vmatpush1.xpose.msra.mxu0 0.0
        %344 = vmatprep.subr.mxu0 0.0
        %345 = vmatpush1.xpose.msra.mxu0 0.0
        %346 = vmatprep.subr.mxu0 0.0
        %347 = vmatpush1.xpose.msra.mxu0 0.0
        %348 = vmatprep.subr.mxu0 0.0
        %349 = vmatpush1.xpose.msra.mxu0 0.0
        %350 = vmatprep.subr.mxu0 0.0
        %351 = vmatpush1.xpose.msra.mxu0 0.0
        %352 = vmatprep.subr.mxu0 0.0
        %353 = vmatpush1.xpose.msra.mxu0 0.0
        %354 = vmatprep.subr.mxu0 0.0
        %355 = vmatpush1.xpose.msra.mxu0 0.0
        %356 = vmatprep.subr.mxu0 0.0
        %357 = vmatpush1.xpose.msra.mxu0 0.0
        %358 = vmatprep.subr.mxu0 0.0
        %359 = vmatpush1.xpose.msra.mxu0 0.0
        %360 = vmatprep.subr.mxu0 0.0
        %361 = vmatpush1.xpose.msra.mxu0 0.0
        %362 = vmatprep.subr.mxu0 0.0
        %363 = vmatpush1.xpose.msra.mxu0 0.0
        %364 = vmatprep.subr.mxu0 0.0
        %365 = vmatpush1.xpose.msra.mxu0 0.0
        %366 = vmatprep.subr.mxu0 0.0
        %367 = vmatpush1.xpose.msra.mxu0 0.0
        %368 = vmatprep.subr.mxu0 0.0
        %369 = vmatpush1.xpose.msra.mxu0 0.0
        %370 = vmatprep.subr.mxu0 0.0
        %371 = vmatpush1.xpose.msra.mxu0 0.0
        %372 = vmatprep.subr.mxu0 0.0
        %373 = vmatpush1.xpose.msra.mxu0 0.0
        %374 = vmatprep.subr.mxu0 0.0
        %375 = vmatpush1.xpose.msra.mxu0 0.0
        %376 = vmatprep.subr.mxu0 0.0
        %377 = vmatpush1.xpose.msra.mxu0 0.0
        %378 = vmatprep.subr.mxu0 0.0
        %379 = vmatpush1.xpose.msra.mxu0 0.0
        %380 = vmatprep.subr.mxu0 0.0
        %381 = vmatpush1.xpose.msra.mxu0 0.0
        %382 = vmatprep.subr.mxu0 0.0
        %383 = vmatpush1.xpose.msra.mxu0 0.0
        %384 = vmatprep.subr.mxu0 0.0
        %385 = vmatpush1.xpose.msra.mxu0 0.0
        %386 = vmatprep.subr.mxu0 0.0
        %387 = vmatpush1.xpose.msra.mxu0 0.0
        %388 = vmatprep.subr.mxu0 0.0
        %389 = vmatpush1.xpose.msra.mxu0 0.0
        %390 = vmatprep.subr.mxu0 0.0
        %391 = vmatpush1.xpose.msra.mxu0 0.0
        %392 = vmatprep.subr.mxu0 0.0
        %393 = vmatpush1.xpose.msra.mxu0 0.0
        %394 = vmatprep.subr.mxu0 0.0
        %395 = vmatpush1.xpose.msra.mxu0 0.0
        %396 = vmatprep.subr.mxu0 0.0
        %397 = vmatpush1.xpose.msra.mxu0 0.0
        %398 = vmatprep.subr.mxu0 0.0
        %399 = vmatpush1.xpose.msra.mxu0 0.0
        %400 = vmatprep.mubr.f32.mxu0 0.0
        %401 = vmatmul.mubr.f32.gmra.mrb[0].mxu0 %v331
        %v402 = vpop.f32.mrb[0].mxu0
        %v403 = vadd.f32 0.0, %v402
        %v404 = vpop.f32.mrb[0].mxu0
        %405 = vdwg.mxu0
        %v406 = vmul.f32 %v403, 0.5
        %vm407 = vcmask 64512
        %v408 = vsel %vm407, %v406, -inf
        %409 = vmax.xlane.f32.xlu0 %v408
        %v410 = vpop.xlane.xlu0 %409
        %v411 = vsub.f32 %v406, %v410
        %v412 = vmul.f32 %v411, 1.442695
        %v413 = vpow.pop %v412
        %v414 = vsel %vm407, %v413, 0.0
        %415 = vadd.xlane.f32.xlu0 %v414
        %v416 = vpop.xlane.xlu0 %415
        %v418 = vsel %vm407, %v413, 0
        %420 = vmatprep.subr.mxu0 0.0
        %421 = vmatpush1.msra.mxu0 %v328
        %422 = vmatprep.subr.mxu0 0.0
        %423 = vmatpush1.msra.mxu0 0.0
        %424 = vmatprep.subr.mxu0 0.0
        %425 = vmatpush1.msra.mxu0 0.0
        %426 = vmatprep.subr.mxu0 0.0
        %427 = vmatpush1.msra.mxu0 0.0
        %428 = vmatprep.subr.mxu0 0.0
        %429 = vmatpush1.msra.mxu0 0.0
        %430 = vmatprep.subr.mxu0 0.0
        %431 = vmatpush1.msra.mxu0 0.0
        %432 = vmatprep.subr.mxu0 0.0
        %433 = vmatpush1.msra.mxu0 0.0
        %434 = vmatprep.subr.mxu0 0.0
        %435 = vmatpush1.msra.mxu0 0.0
        %436 = vmatprep.subr.mxu0 0.0
        %437 = vmatpush1.msra.mxu0 0.0
        %438 = vmatprep.subr.mxu0 0.0
        %439 = vmatpush1.msra.mxu0 0.0
        %440 = vmatprep.subr.mxu0 0.0
        %441 = vmatpush1.msra.mxu0 0.0
        %442 = vmatprep.subr.mxu0 0.0
        %443 = vmatpush1.msra.mxu0 0.0
        %444 = vmatprep.subr.mxu0 0.0
        %445 = vmatpush1.msra.mxu0 0.0
        %446 = vmatprep.subr.mxu0 0.0
        %447 = vmatpush1.msra.mxu0 0.0
        %448 = vmatprep.subr.mxu0 0.0
        %449 = vmatpush1.msra.mxu0 0.0
        %450 = vmatprep.subr.mxu0 0.0
        %451 = vmatpush1.msra.mxu0 0.0
        %452 = vmatprep.subr.mxu0 0.0
        %453 = vmatpush1.msra.mxu0 0.0
        %454 = vmatprep.subr.mxu0 0.0
        %455 = vmatpush1.msra.mxu0 0.0
        %456 = vmatprep.subr.mxu0 0.0
        %457 = vmatpush1.msra.mxu0 0.0
        %458 = vmatprep.subr.mxu0 0.0
        %459 = vmatpush1.msra.mxu0 0.0
        %460 = vmatprep.subr.mxu0 0.0
        %461 = vmatpush1.msra.mxu0 0.0
        %462 = vmatprep.subr.mxu0 0.0
        %463 = vmatpush1.msra.mxu0 0.0
        %464 = vmatprep.subr.mxu0 0.0
        %465 = vmatpush1.msra.mxu0 0.0
        %466 = vmatprep.subr.mxu0 0.0
        %467 = vmatpush1.msra.mxu0 0.0
        %468 = vmatprep.subr.mxu0 0.0
        %469 = vmatpush1.msra.mxu0 0.0
        %470 = vmatprep.subr.mxu0 0.0
        %471 = vmatpush1.msra.mxu0 0.0
        %472 = vmatprep.subr.mxu0 0.0
        %473 = vmatpush1.msra.mxu0 0.0
        %474 = vmatprep.subr.mxu0 0.0
        %475 = vmatpush1.msra.mxu0 0.0
        %476 = vmatprep.subr.mxu0 0.0
        %477 = vmatpush1.msra.mxu0 0.0
        %478 = vmatprep.subr.mxu0 0.0
        %479 = vmatpush1.msra.mxu0 0.0
        %480 = vmatprep.subr.mxu0 0.0
        %481 = vmatpush1.msra.mxu0 0.0
        %482 = vmatprep.subr.mxu0 0.0
        %483 = vmatpush1.msra.mxu0 0.0
        %484 = vmatprep.mubr.f32.mxu0 0.0
        %485 = vmatmul.mubr.f32.gmra.mrb[0].mxu0 %v418
        %v486 = vpop.f32.mrb[0].mxu0
        %v487 = vadd.f32 0.0, %v486
        %v488 = vpop.f32.mrb[0].mxu0
        %489 = vdwg.mxu0
        %v490 = vrcp.pop %v416
        %v491 = vmul.f32 %v487, %v490
        %492 = vst.msk [vmem:[#allocation2] sm:$0xff] %vm329, %v491
        %493 = vrot.lane.b32.xlu0 %v326, 124
        %v494 = vpop.permute.xlu0 %493
        %495 = vrot.lane.b32.xlu0 %v327, 124
        %v496 = vpop.permute.xlu0 %495
        %v497 = vsel %vm329, %v494, 0
        %v499 = vsel %vm329, %v496, 0
        %501 = vmatprep.subr.mxu0 0.0
        %502 = vmatpush1.xpose.msra.mxu0 %v499
        %503 = vmatprep.subr.mxu0 0.0
        %504 = vmatpush1.xpose.msra.mxu0 0.0
        %505 = vmatprep.subr.mxu0 0.0
        %506 = vmatpush1.xpose.msra.mxu0 0.0
        %507 = vmatprep.subr.mxu0 0.0
        %508 = vmatpush1.xpose.msra.mxu0 0.0
        %509 = vmatprep.subr.mxu0 0.0
        %510 = vmatpush1.xpose.msra.mxu0 0.0
        %511 = vmatprep.subr.mxu0 0.0
        %512 = vmatpush1.xpose.msra.mxu0 0.0
        %513 = vmatprep.subr.mxu0 0.0
        %514 = vmatpush1.xpose.msra.mxu0 0.0
        %515 = vmatprep.subr.mxu0 0.0
        %516 = vmatpush1.xpose.msra.mxu0 0.0
        %517 = vmatprep.subr.mxu0 0.0
        %518 = vmatpush1.xpose.msra.mxu0 0.0
        %519 = vmatprep.subr.mxu0 0.0
        %520 = vmatpush1.xpose.msra.mxu0 0.0
        %521 = vmatprep.subr.mxu0 0.0
        %522 = vmatpush1.xpose.msra.mxu0 0.0
        %523 = vmatprep.subr.mxu0 0.0
        %524 = vmatpush1.xpose.msra.mxu0 0.0
        %525 = vmatprep.subr.mxu0 0.0
        %526 = vmatpush1.xpose.msra.mxu0 0.0
        %527 = vmatprep.subr.mxu0 0.0
        %528 = vmatpush1.xpose.msra.mxu0 0.0
        %529 = vmatprep.subr.mxu0 0.0
        %530 = vmatpush1.xpose.msra.mxu0 0.0
        %531 = vmatprep.subr.mxu0 0.0
        %532 = vmatpush1.xpose.msra.mxu0 0.0
        %533 = vmatprep.subr.mxu0 0.0
        %534 = vmatpush1.xpose.msra.mxu0 0.0
        %535 = vmatprep.subr.mxu0 0.0
        %536 = vmatpush1.xpose.msra.mxu0 0.0
        %537 = vmatprep.subr.mxu0 0.0
        %538 = vmatpush1.xpose.msra.mxu0 0.0
        %539 = vmatprep.subr.mxu0 0.0
        %540 = vmatpush1.xpose.msra.mxu0 0.0
        %541 = vmatprep.subr.mxu0 0.0
        %542 = vmatpush1.xpose.msra.mxu0 0.0
        %543 = vmatprep.subr.mxu0 0.0
        %544 = vmatpush1.xpose.msra.mxu0 0.0
        %545 = vmatprep.subr.mxu0 0.0
        %546 = vmatpush1.xpose.msra.mxu0 0.0
        %547 = vmatprep.subr.mxu0 0.0
        %548 = vmatpush1.xpose.msra.mxu0 0.0
        %549 = vmatprep.subr.mxu0 0.0
        %550 = vmatpush1.xpose.msra.mxu0 0.0
        %551 = vmatprep.subr.mxu0 0.0
        %552 = vmatpush1.xpose.msra.mxu0 0.0
        %553 = vmatprep.subr.mxu0 0.0
        %554 = vmatpush1.xpose.msra.mxu0 0.0
        %555 = vmatprep.subr.mxu0 0.0
        %556 = vmatpush1.xpose.msra.mxu0 0.0
        %557 = vmatprep.subr.mxu0 0.0
        %558 = vmatpush1.xpose.msra.mxu0 0.0
        %559 = vmatprep.subr.mxu0 0.0
        %560 = vmatpush1.xpose.msra.mxu0 0.0
        %561 = vmatprep.subr.mxu0 0.0
        %562 = vmatpush1.xpose.msra.mxu0 0.0
        %563 = vmatprep.subr.mxu0 0.0
        %564 = vmatpush1.xpose.msra.mxu0 0.0
        %565 = vmatprep.mubr.f32.mxu0 0.0
        %566 = vmatmul.mubr.f32.gmra.mrb[0].mxu0 %v497
        %v567 = vpop.f32.mrb[0].mxu0
        %v568 = vadd.f32 0.0, %v567
        %v569 = vpop.f32.mrb[0].mxu0
        %570 = vdwg.mxu0
        %v571 = vmul.f32 %v568, 0.5
        %v572 = vsel %vm407, %v571, -inf
        %573 = vmax.xlane.f32.xlu0 %v572
        %v574 = vpop.xlane.xlu0 %573
        %v575 = vsub.f32 %v571, %v574
        %v576 = vmul.f32 %v575, 1.442695
        %v577 = vpow.pop %v576
        %v578 = vsel %vm407, %v577, 0.0
        %579 = vadd.xlane.f32.xlu0 %v578
        %v580 = vpop.xlane.xlu0 %579
        %582 = vrot.lane.b32.xlu0 %v328, 124
        %v583 = vpop.permute.xlu0 %582
        %v586 = vsel %vm407, %v577, 0
        %588 = vmatprep.subr.mxu0 0.0
        %589 = vmatpush1.msra.mxu0 %v583
        %590 = vmatprep.subr.mxu0 0.0
        %591 = vmatpush1.msra.mxu0 0.0
        %592 = vmatprep.subr.mxu0 0.0
        %593 = vmatpush1.msra.mxu0 0.0
        %594 = vmatprep.subr.mxu0 0.0
        %595 = vmatpush1.msra.mxu0 0.0
        %596 = vmatprep.subr.mxu0 0.0
        %597 = vmatpush1.msra.mxu0 0.0
        %598 = vmatprep.subr.mxu0 0.0
        %599 = vmatpush1.msra.mxu0 0.0
        %600 = vmatprep.subr.mxu0 0.0
        %601 = vmatpush1.msra.mxu0 0.0
        %602 = vmatprep.subr.mxu0 0.0
        %603 = vmatpush1.msra.mxu0 0.0
        %604 = vmatprep.subr.mxu0 0.0
        %605 = vmatpush1.msra.mxu0 0.0
        %606 = vmatprep.subr.mxu0 0.0
        %607 = vmatpush1.msra.mxu0 0.0
        %608 = vmatprep.subr.mxu0 0.0
        %609 = vmatpush1.msra.mxu0 0.0
        %610 = vmatprep.subr.mxu0 0.0
        %611 = vmatpush1.msra.mxu0 0.0
        %612 = vmatprep.subr.mxu0 0.0
        %613 = vmatpush1.msra.mxu0 0.0
        %614 = vmatprep.subr.mxu0 0.0
        %615 = vmatpush1.msra.mxu0 0.0
        %616 = vmatprep.subr.mxu0 0.0
        %617 = vmatpush1.msra.mxu0 0.0
        %618 = vmatprep.subr.mxu0 0.0
        %619 = vmatpush1.msra.mxu0 0.0
        %620 = vmatprep.subr.mxu0 0.0
        %621 = vmatpush1.msra.mxu0 0.0
        %622 = vmatprep.subr.mxu0 0.0
        %623 = vmatpush1.msra.mxu0 0.0
        %624 = vmatprep.subr.mxu0 0.0
        %625 = vmatpush1.msra.mxu0 0.0
        %626 = vmatprep.subr.mxu0 0.0
        %627 = vmatpush1.msra.mxu0 0.0
        %628 = vmatprep.subr.mxu0 0.0
        %629 = vmatpush1.msra.mxu0 0.0
        %630 = vmatprep.subr.mxu0 0.0
        %631 = vmatpush1.msra.mxu0 0.0
        %632 = vmatprep.subr.mxu0 0.0
        %633 = vmatpush1.msra.mxu0 0.0
        %634 = vmatprep.subr.mxu0 0.0
        %635 = vmatpush1.msra.mxu0 0.0
        %636 = vmatprep.subr.mxu0 0.0
        %637 = vmatpush1.msra.mxu0 0.0
        %638 = vmatprep.subr.mxu0 0.0
        %639 = vmatpush1.msra.mxu0 0.0
        %640 = vmatprep.subr.mxu0 0.0
        %641 = vmatpush1.msra.mxu0 0.0
        %642 = vmatprep.subr.mxu0 0.0
        %643 = vmatpush1.msra.mxu0 0.0
        %644 = vmatprep.subr.mxu0 0.0
        %645 = vmatpush1.msra.mxu0 0.0
        %646 = vmatprep.subr.mxu0 0.0
        %647 = vmatpush1.msra.mxu0 0.0
        %648 = vmatprep.subr.mxu0 0.0
        %649 = vmatpush1.msra.mxu0 0.0
        %650 = vmatprep.subr.mxu0 0.0
        %651 = vmatpush1.msra.mxu0 0.0
        %652 = vmatprep.mubr.f32.mxu0 0.0
        %653 = vmatmul.mubr.f32.gmra.mrb[0].mxu0 %v586
        %v654 = vpop.f32.mrb[0].mxu0
        %v655 = vadd.f32 0.0, %v654
        %v656 = vpop.f32.mrb[0].mxu0
        %657 = vdwg.mxu0
        %v658 = vrcp.pop %v580
        %v659 = vmul.f32 %v655, %v658
        %661 = vrot.lane.b32.xlu0 %v659, 4
        %v662 = vpop.permute.xlu0 %661
        %vm664 = vcmask 64544
        %665 = vst.msk [vmem:[#allocation2] sm:$0xff] %vm664, %v662
        %666 = vrot.lane.b32.xlu0 %v326, 120
        %v667 = vpop.permute.xlu0 %666
        %668 = vrot.lane.b32.xlu0 %v327, 120
        %v669 = vpop.permute.xlu0 %668
        %v670 = vsel %vm329, %v667, 0
        %v672 = vsel %vm329, %v669, 0
        %674 = vmatprep.subr.mxu0 0.0
        %675 = vmatpush1.xpose.msra.mxu0 %v672
        %676 = vmatprep.subr.mxu0 0.0
        %677 = vmatpush1.xpose.msra.mxu0 0.0
        %678 = vmatprep.subr.mxu0 0.0
        %679 = vmatpush1.xpose.msra.mxu0 0.0
        %680 = vmatprep.subr.mxu0 0.0
        %681 = vmatpush1.xpose.msra.mxu0 0.0
        %682 = vmatprep.subr.mxu0 0.0
        %683 = vmatpush1.xpose.msra.mxu0 0.0
        %684 = vmatprep.subr.mxu0 0.0
        %685 = vmatpush1.xpose.msra.mxu0 0.0
        %686 = vmatprep.subr.mxu0 0.0
        %687 = vmatpush1.xpose.msra.mxu0 0.0
        %688 = vmatprep.subr.mxu0 0.0
        %689 = vmatpush1.xpose.msra.mxu0 0.0
        %690 = vmatprep.subr.mxu0 0.0
        %691 = vmatpush1.xpose.msra.mxu0 0.0
        %692 = vmatprep.subr.mxu0 0.0
        %693 = vmatpush1.xpose.msra.mxu0 0.0
        %694 = vmatprep.subr.mxu0 0.0
        %695 = vmatpush1.xpose.msra.mxu0 0.0
        %696 = vmatprep.subr.mxu0 0.0
        %697 = vmatpush1.xpose.msra.mxu0 0.0
        %698 = vmatprep.subr.mxu0 0.0
        %699 = vmatpush1.xpose.msra.mxu0 0.0
        %700 = vmatprep.subr.mxu0 0.0
        %701 = vmatpush1.xpose.msra.mxu0 0.0
        %702 = vmatprep.subr.mxu0 0.0
        %703 = vmatpush1.xpose.msra.mxu0 0.0
        %704 = vmatprep.subr.mxu0 0.0
        %705 = vmatpush1.xpose.msra.mxu0 0.0
        %706 = vmatprep.subr.mxu0 0.0
        %707 = vmatpush1.xpose.msra.mxu0 0.0
        %708 = vmatprep.subr.mxu0 0.0
        %709 = vmatpush1.xpose.msra.mxu0 0.0
        %710 = vmatprep.subr.mxu0 0.0
        %711 = vmatpush1.xpose.msra.mxu0 0.0
        %712 = vmatprep.subr.mxu0 0.0
        %713 = vmatpush1.xpose.msra.mxu0 0.0
        %714 = vmatprep.subr.mxu0 0.0
        %715 = vmatpush1.xpose.msra.mxu0 0.0
        %716 = vmatprep.subr.mxu0 0.0
        %717 = vmatpush1.xpose.msra.mxu0 0.0
        %718 = vmatprep.subr.mxu0 0.0
        %719 = vmatpush1.xpose.msra.mxu0 0.0
        %720 = vmatprep.subr.mxu0 0.0
        %721 = vmatpush1.xpose.msra.mxu0 0.0
        %722 = vmatprep.subr.mxu0 0.0
        %723 = vmatpush1.xpose.msra.mxu0 0.0
        %724 = vmatprep.subr.mxu0 0.0
        %725 = vmatpush1.xpose.msra.mxu0 0.0
        %726 = vmatprep.subr.mxu0 0.0
        %727 = vmatpush1.xpose.msra.mxu0 0.0
        %728 = vmatprep.subr.mxu0 0.0
        %729 = vmatpush1.xpose.msra.mxu0 0.0
        %730 = vmatprep.subr.mxu0 0.0
        %731 = vmatpush1.xpose.msra.mxu0 0.0
        %732 = vmatprep.subr.mxu0 0.0
        %733 = vmatpush1.xpose.msra.mxu0 0.0
        %734 = vmatprep.subr.mxu0 0.0
        %735 = vmatpush1.xpose.msra.mxu0 0.0
        %736 = vmatprep.subr.mxu0 0.0
        %737 = vmatpush1.xpose.msra.mxu0 0.0
        %738 = vmatprep.mubr.f32.mxu0 0.0
        %739 = vmatmul.mubr.f32.gmra.mrb[0].mxu0 %v670
        %v740 = vpop.f32.mrb[0].mxu0
        %v741 = vadd.f32 0.0, %v740
        %v742 = vpop.f32.mrb[0].mxu0
        %743 = vdwg.mxu0
        %v744 = vmul.f32 %v741, 0.5
        %v745 = vsel %vm407, %v744, -inf
        %746 = vmax.xlane.f32.xlu0 %v745
        %v747 = vpop.xlane.xlu0 %746
        %v748 = vsub.f32 %v744, %v747
        %v749 = vmul.f32 %v748, 1.442695
        %v750 = vpow.pop %v749
        %v751 = vsel %vm407, %v750, 0.0
        %752 = vadd.xlane.f32.xlu0 %v751
        %v753 = vpop.xlane.xlu0 %752
        %754 = vrot.lane.b32.xlu0 %v328, 120
        %v755 = vpop.permute.xlu0 %754
        %v758 = vsel %vm407, %v750, 0
        %760 = vmatprep.subr.mxu0 0.0
        %761 = vmatpush1.msra.mxu0 %v755
        %762 = vmatprep.subr.mxu0 0.0
        %763 = vmatpush1.msra.mxu0 0.0
        %764 = vmatprep.subr.mxu0 0.0
        %765 = vmatpush1.msra.mxu0 0.0
        %766 = vmatprep.subr.mxu0 0.0
        %767 = vmatpush1.msra.mxu0 0.0
        %768 = vmatprep.subr.mxu0 0.0
        %769 = vmatpush1.msra.mxu0 0.0
        %770 = vmatprep.subr.mxu0 0.0
        %771 = vmatpush1.msra.mxu0 0.0
        %772 = vmatprep.subr.mxu0 0.0
        %773 = vmatpush1.msra.mxu0 0.0
        %774 = vmatprep.subr.mxu0 0.0
        %775 = vmatpush1.msra.mxu0 0.0
        %776 = vmatprep.subr.mxu0 0.0
        %777 = vmatpush1.msra.mxu0 0.0
        %778 = vmatprep.subr.mxu0 0.0
        %779 = vmatpush1.msra.mxu0 0.0
        %780 = vmatprep.subr.mxu0 0.0
        %781 = vmatpush1.msra.mxu0 0.0
        %782 = vmatprep.subr.mxu0 0.0
        %783 = vmatpush1.msra.mxu0 0.0
        %784 = vmatprep.subr.mxu0 0.0
        %785 = vmatpush1.msra.mxu0 0.0
        %786 = vmatprep.subr.mxu0 0.0
        %787 = vmatpush1.msra.mxu0 0.0
        %788 = vmatprep.subr.mxu0 0.0
        %789 = vmatpush1.msra.mxu0 0.0
        %790 = vmatprep.subr.mxu0 0.0
        %791 = vmatpush1.msra.mxu0 0.0
        %792 = vmatprep.subr.mxu0 0.0
        %793 = vmatpush1.msra.mxu0 0.0
        %794 = vmatprep.subr.mxu0 0.0
        %795 = vmatpush1.msra.mxu0 0.0
        %796 = vmatprep.subr.mxu0 0.0
        %797 = vmatpush1.msra.mxu0 0.0
        %798 = vmatprep.subr.mxu0 0.0
        %799 = vmatpush1.msra.mxu0 0.0
        %800 = vmatprep.subr.mxu0 0.0
        %801 = vmatpush1.msra.mxu0 0.0
        %802 = vmatprep.subr.mxu0 0.0
        %803 = vmatpush1.msra.mxu0 0.0
        %804 = vmatprep.subr.mxu0 0.0
        %805 = vmatpush1.msra.mxu0 0.0
        %806 = vmatprep.subr.mxu0 0.0
        %807 = vmatpush1.msra.mxu0 0.0
        %808 = vmatprep.subr.mxu0 0.0
        %809 = vmatpush1.msra.mxu0 0.0
        %810 = vmatprep.subr.mxu0 0.0
        %811 = vmatpush1.msra.mxu0 0.0
        %812 = vmatprep.subr.mxu0 0.0
        %813 = vmatpush1.msra.mxu0 0.0
        %814 = vmatprep.subr.mxu0 0.0
        %815 = vmatpush1.msra.mxu0 0.0
        %816 = vmatprep.subr.mxu0 0.0
        %817 = vmatpush1.msra.mxu0 0.0
        %818 = vmatprep.subr.mxu0 0.0
        %819 = vmatpush1.msra.mxu0 0.0
        %820 = vmatprep.subr.mxu0 0.0
        %821 = vmatpush1.msra.mxu0 0.0
        %822 = vmatprep.subr.mxu0 0.0
        %823 = vmatpush1.msra.mxu0 0.0
        %824 = vmatprep.mubr.f32.mxu0 0.0
        %825 = vmatmul.mubr.f32.gmra.mrb[0].mxu0 %v758
        %v826 = vpop.f32.mrb[0].mxu0
        %v827 = vadd.f32 0.0, %v826
        %v828 = vpop.f32.mrb[0].mxu0
        %829 = vdwg.mxu0
        %v830 = vrcp.pop %v753
        %v831 = vmul.f32 %v827, %v830
        %833 = vrot.lane.b32.xlu0 %v831, 8
        %v834 = vpop.permute.xlu0 %833
        %vm836 = vcmask 97344
        %837 = vst.msk [vmem:[#allocation2] sm:$0xff] %vm836, %v834
        %838 = vrot.lane.b32.xlu0 %v326, 116
        %v839 = vpop.permute.xlu0 %838
        %840 = vrot.lane.b32.xlu0 %v327, 116
        %v841 = vpop.permute.xlu0 %840
        %v842 = vsel %vm329, %v839, 0
        %v844 = vsel %vm329, %v841, 0
        %846 = vmatprep.subr.mxu0 0.0
        %847 = vmatpush1.xpose.msra.mxu0 %v844
        %848 = vmatprep.subr.mxu0 0.0
        %849 = vmatpush1.xpose.msra.mxu0 0.0
        %850 = vmatprep.subr.mxu0 0.0
        %851 = vmatpush1.xpose.msra.mxu0 0.0
        %852 = vmatprep.subr.mxu0 0.0
        %853 = vmatpush1.xpose.msra.mxu0 0.0
        %854 = vmatprep.subr.mxu0 0.0
        %855 = vmatpush1.xpose.msra.mxu0 0.0
        %856 = vmatprep.subr.mxu0 0.0
        %857 = vmatpush1.xpose.msra.mxu0 0.0
        %858 = vmatprep.subr.mxu0 0.0
        %859 = vmatpush1.xpose.msra.mxu0 0.0
        %860 = vmatprep.subr.mxu0 0.0
        %861 = vmatpush1.xpose.msra.mxu0 0.0
        %862 = vmatprep.subr.mxu0 0.0
        %863 = vmatpush1.xpose.msra.mxu0 0.0
        %864 = vmatprep.subr.mxu0 0.0
        %865 = vmatpush1.xpose.msra.mxu0 0.0
        %866 = vmatprep.subr.mxu0 0.0
        %867 = vmatpush1.xpose.msra.mxu0 0.0
        %868 = vmatprep.subr.mxu0 0.0
        %869 = vmatpush1.xpose.msra.mxu0 0.0
        %870 = vmatprep.subr.mxu0 0.0
        %871 = vmatpush1.xpose.msra.mxu0 0.0
        %872 = vmatprep.subr.mxu0 0.0
        %873 = vmatpush1.xpose.msra.mxu0 0.0
        %874 = vmatprep.subr.mxu0 0.0
        %875 = vmatpush1.xpose.msra.mxu0 0.0
        %876 = vmatprep.subr.mxu0 0.0
        %877 = vmatpush1.xpose.msra.mxu0 0.0
        %878 = vmatprep.subr.mxu0 0.0
        %879 = vmatpush1.xpose.msra.mxu0 0.0
        %880 = vmatprep.subr.mxu0 0.0
        %881 = vmatpush1.xpose.msra.mxu0 0.0
        %882 = vmatprep.subr.mxu0 0.0
        %883 = vmatpush1.xpose.msra.mxu0 0.0
        %884 = vmatprep.subr.mxu0 0.0
        %885 = vmatpush1.xpose.msra.mxu0 0.0
        %886 = vmatprep.subr.mxu0 0.0
        %887 = vmatpush1.xpose.msra.mxu0 0.0
        %888 = vmatprep.subr.mxu0 0.0
        %889 = vmatpush1.xpose.msra.mxu0 0.0
        %890 = vmatprep.subr.mxu0 0.0
        %891 = vmatpush1.xpose.msra.mxu0 0.0
        %892 = vmatprep.subr.mxu0 0.0
        %893 = vmatpush1.xpose.msra.mxu0 0.0
        %894 = vmatprep.subr.mxu0 0.0
        %895 = vmatpush1.xpose.msra.mxu0 0.0
        %896 = vmatprep.subr.mxu0 0.0
        %897 = vmatpush1.xpose.msra.mxu0 0.0
        %898 = vmatprep.subr.mxu0 0.0
        %899 = vmatpush1.xpose.msra.mxu0 0.0
        %900 = vmatprep.subr.mxu0 0.0
        %901 = vmatpush1.xpose.msra.mxu0 0.0
        %902 = vmatprep.subr.mxu0 0.0
        %903 = vmatpush1.xpose.msra.mxu0 0.0
        %904 = vmatprep.subr.mxu0 0.0
        %905 = vmatpush1.xpose.msra.mxu0 0.0
        %906 = vmatprep.subr.mxu0 0.0
        %907 = vmatpush1.xpose.msra.mxu0 0.0
        %908 = vmatprep.subr.mxu0 0.0
        %909 = vmatpush1.xpose.msra.mxu0 0.0
        %910 = vmatprep.mubr.f32.mxu0 0.0
        %911 = vmatmul.mubr.f32.gmra.mrb[0].mxu0 %v842
        %v912 = vpop.f32.mrb[0].mxu0
        %v913 = vadd.f32 0.0, %v912
        %v914 = vpop.f32.mrb[0].mxu0
        %915 = vdwg.mxu0
        %v916 = vmul.f32 %v913, 0.5
        %v917 = vsel %vm407, %v916, -inf
        %918 = vmax.xlane.f32.xlu0 %v917
        %v919 = vpop.xlane.xlu0 %918
        %v920 = vsub.f32 %v916, %v919
        %v921 = vmul.f32 %v920, 1.442695
        %v922 = vpow.pop %v921
        %v923 = vsel %vm407, %v922, 0.0
        %924 = vadd.xlane.f32.xlu0 %v923
        %v925 = vpop.xlane.xlu0 %924
        %926 = vrot.lane.b32.xlu0 %v328, 116
        %v927 = vpop.permute.xlu0 %926
        %v930 = vsel %vm407, %v922, 0
        %932 = vmatprep.subr.mxu0 0.0
        %933 = vmatpush1.msra.mxu0 %v927
        %934 = vmatprep.subr.mxu0 0.0
        %935 = vmatpush1.msra.mxu0 0.0
        %936 = vmatprep.subr.mxu0 0.0
        %937 = vmatpush1.msra.mxu0 0.0
        %938 = vmatprep.subr.mxu0 0.0
        %939 = vmatpush1.msra.mxu0 0.0
        %940 = vmatprep.subr.mxu0 0.0
        %941 = vmatpush1.msra.mxu0 0.0
        %942 = vmatprep.subr.mxu0 0.0
        %943 = vmatpush1.msra.mxu0 0.0
        %944 = vmatprep.subr.mxu0 0.0
        %945 = vmatpush1.msra.mxu0 0.0
        %946 = vmatprep.subr.mxu0 0.0
        %947 = vmatpush1.msra.mxu0 0.0
        %948 = vmatprep.subr.mxu0 0.0
        %949 = vmatpush1.msra.mxu0 0.0
        %950 = vmatprep.subr.mxu0 0.0
        %951 = vmatpush1.msra.mxu0 0.0
        %952 = vmatprep.subr.mxu0 0.0
        %953 = vmatpush1.msra.mxu0 0.0
        %954 = vmatprep.subr.mxu0 0.0
        %955 = vmatpush1.msra.mxu0 0.0
        %956 = vmatprep.subr.mxu0 0.0
        %957 = vmatpush1.msra.mxu0 0.0
        %958 = vmatprep.subr.mxu0 0.0
        %959 = vmatpush1.msra.mxu0 0.0
        %960 = vmatprep.subr.mxu0 0.0
        %961 = vmatpush1.msra.mxu0 0.0
        %962 = vmatprep.subr.mxu0 0.0
        %963 = vmatpush1.msra.mxu0 0.0
        %964 = vmatprep.subr.mxu0 0.0
        %965 = vmatpush1.msra.mxu0 0.0
        %966 = vmatprep.subr.mxu0 0.0
        %967 = vmatpush1.msra.mxu0 0.0
        %968 = vmatprep.subr.mxu0 0.0
        %969 = vmatpush1.msra.mxu0 0.0
        %970 = vmatprep.subr.mxu0 0.0
        %971 = vmatpush1.msra.mxu0 0.0
        %972 = vmatprep.subr.mxu0 0.0
        %973 = vmatpush1.msra.mxu0 0.0
        %974 = vmatprep.subr.mxu0 0.0
        %975 = vmatpush1.msra.mxu0 0.0
        %976 = vmatprep.subr.mxu0 0.0
        %977 = vmatpush1.msra.mxu0 0.0
        %978 = vmatprep.subr.mxu0 0.0
        %979 = vmatpush1.msra.mxu0 0.0
        %980 = vmatprep.subr.mxu0 0.0
        %981 = vmatpush1.msra.mxu0 0.0
        %982 = vmatprep.subr.mxu0 0.0
        %983 = vmatpush1.msra.mxu0 0.0
        %984 = vmatprep.subr.mxu0 0.0
        %985 = vmatpush1.msra.mxu0 0.0
        %986 = vmatprep.subr.mxu0 0.0
        %987 = vmatpush1.msra.mxu0 0.0
        %988 = vmatprep.subr.mxu0 0.0
        %989 = vmatpush1.msra.mxu0 0.0
        %990 = vmatprep.subr.mxu0 0.0
        %991 = vmatpush1.msra.mxu0 0.0
        %992 = vmatprep.subr.mxu0 0.0
        %993 = vmatpush1.msra.mxu0 0.0
        %994 = vmatprep.subr.mxu0 0.0
        %995 = vmatpush1.msra.mxu0 0.0
        %996 = vmatprep.mubr.f32.mxu0 0.0
        %997 = vmatmul.mubr.f32.gmra.mrb[0].mxu0 %v930
        %v998 = vpop.f32.mrb[0].mxu0
        %v999 = vadd.f32 0.0, %v998
        %v1000 = vpop.f32.mrb[0].mxu0
        %1001 = vdwg.mxu0
        %v1002 = vrcp.pop %v925
        %v1003 = vmul.f32 %v999, %v1002
        %1005 = vrot.lane.b32.xlu0 %v1003, 12
        %v1006 = vpop.permute.xlu0 %1005
        %vm1008 = vcmask 130144
        %1009 = vst.msk [vmem:[#allocation2] sm:$0xff] %vm1008, %v1006
        %1010 = vrot.lane.b32.xlu0 %v326, 112
        %v1011 = vpop.permute.xlu0 %1010
        %1012 = vrot.lane.b32.xlu0 %v327, 112
        %v1013 = vpop.permute.xlu0 %1012
        %v1014 = vsel %vm329, %v1011, 0
        %v1016 = vsel %vm329, %v1013, 0
        %1018 = vmatprep.subr.mxu0 0.0
        %1019 = vmatpush1.xpose.msra.mxu0 %v1016
        %1020 = vmatprep.subr.mxu0 0.0
        %1021 = vmatpush1.xpose.msra.mxu0 0.0
        %1022 = vmatprep.subr.mxu0 0.0
        %1023 = vmatpush1.xpose.msra.mxu0 0.0
        %1024 = vmatprep.subr.mxu0 0.0
        %1025 = vmatpush1.xpose.msra.mxu0 0.0
        %1026 = vmatprep.subr.mxu0 0.0
        %1027 = vmatpush1.xpose.msra.mxu0 0.0
        %1028 = vmatprep.subr.mxu0 0.0
        %1029 = vmatpush1.xpose.msra.mxu0 0.0
        %1030 = vmatprep.subr.mxu0 0.0
        %1031 = vmatpush1.xpose.msra.mxu0 0.0
        %1032 = vmatprep.subr.mxu0 0.0
        %1033 = vmatpush1.xpose.msra.mxu0 0.0
        %1034 = vmatprep.subr.mxu0 0.0
        %1035 = vmatpush1.xpose.msra.mxu0 0.0
        %1036 = vmatprep.subr.mxu0 0.0
        %1037 = vmatpush1.xpose.msra.mxu0 0.0
        %1038 = vmatprep.subr.mxu0 0.0
        %1039 = vmatpush1.xpose.msra.mxu0 0.0
        %1040 = vmatprep.subr.mxu0 0.0
        %1041 = vmatpush1.xpose.msra.mxu0 0.0
        %1042 = vmatprep.subr.mxu0 0.0
        %1043 = vmatpush1.xpose.msra.mxu0 0.0
        %1044 = vmatprep.subr.mxu0 0.0
        %1045 = vmatpush1.xpose.msra.mxu0 0.0
        %1046 = vmatprep.subr.mxu0 0.0
        %1047 = vmatpush1.xpose.msra.mxu0 0.0
        %1048 = vmatprep.subr.mxu0 0.0
        %1049 = vmatpush1.xpose.msra.mxu0 0.0
        %1050 = vmatprep.subr.mxu0 0.0
        %1051 = vmatpush1.xpose.msra.mxu0 0.0
        %1052 = vmatprep.subr.mxu0 0.0
        %1053 = vmatpush1.xpose.msra.mxu0 0.0
        %1054 = vmatprep.subr.mxu0 0.0
        %1055 = vmatpush1.xpose.msra.mxu0 0.0
        %1056 = vmatprep.subr.mxu0 0.0
        %1057 = vmatpush1.xpose.msra.mxu0 0.0
        %1058 = vmatprep.subr.mxu0 0.0
        %1059 = vmatpush1.xpose.msra.mxu0 0.0
        %1060 = vmatprep.subr.mxu0 0.0
        %1061 = vmatpush1.xpose.msra.mxu0 0.0
        %1062 = vmatprep.subr.mxu0 0.0
        %1063 = vmatpush1.xpose.msra.mxu0 0.0
        %1064 = vmatprep.subr.mxu0 0.0
        %1065 = vmatpush1.xpose.msra.mxu0 0.0
        %1066 = vmatprep.subr.mxu0 0.0
        %1067 = vmatpush1.xpose.msra.mxu0 0.0
        %1068 = vmatprep.subr.mxu0 0.0
        %1069 = vmatpush1.xpose.msra.mxu0 0.0
        %1070 = vmatprep.subr.mxu0 0.0
        %1071 = vmatpush1.xpose.msra.mxu0 0.0
        %1072 = vmatprep.subr.mxu0 0.0
        %1073 = vmatpush1.xpose.msra.mxu0 0.0
        %1074 = vmatprep.subr.mxu0 0.0
        %1075 = vmatpush1.xpose.msra.mxu0 0.0
        %1076 = vmatprep.subr.mxu0 0.0
        %1077 = vmatpush1.xpose.msra.mxu0 0.0
        %1078 = vmatprep.subr.mxu0 0.0
        %1079 = vmatpush1.xpose.msra.mxu0 0.0
        %1080 = vmatprep.subr.mxu0 0.0
        %1081 = vmatpush1.xpose.msra.mxu0 0.0
        %1082 = vmatprep.mubr.f32.mxu0 0.0
        %1083 = vmatmul.mubr.f32.gmra.mrb[0].mxu0 %v1014
        %v1084 = vpop.f32.mrb[0].mxu0
        %v1085 = vadd.f32 0.0, %v1084
        %v1086 = vpop.f32.mrb[0].mxu0
        %1087 = vdwg.mxu0
        %v1088 = vmul.f32 %v1085, 0.5
        %v1089 = vsel %vm407, %v1088, -inf
        %1090 = vmax.xlane.f32.xlu0 %v1089
        %v1091 = vpop.xlane.xlu0 %1090
        %v1092 = vsub.f32 %v1088, %v1091
        %v1093 = vmul.f32 %v1092, 1.442695
        %v1094 = vpow.pop %v1093
        %v1095 = vsel %vm407, %v1094, 0.0
        %1096 = vadd.xlane.f32.xlu0 %v1095
        %v1097 = vpop.xlane.xlu0 %1096
        %1098 = vrot.lane.b32.xlu0 %v328, 112
        %v1099 = vpop.permute.xlu0 %1098
        %v1102 = vsel %vm407, %v1094, 0
        %1104 = vmatprep.subr.mxu0 0.0
        %1105 = vmatpush1.msra.mxu0 %v1099
        %1106 = vmatprep.subr.mxu0 0.0
        %1107 = vmatpush1.msra.mxu0 0.0
        %1108 = vmatprep.subr.mxu0 0.0
        %1109 = vmatpush1.msra.mxu0 0.0
        %1110 = vmatprep.subr.mxu0 0.0
        %1111 = vmatpush1.msra.mxu0 0.0
        %1112 = vmatprep.subr.mxu0 0.0
        %1113 = vmatpush1.msra.mxu0 0.0
        %1114 = vmatprep.subr.mxu0 0.0
        %1115 = vmatpush1.msra.mxu0 0.0
        %1116 = vmatprep.subr.mxu0 0.0
        %1117 = vmatpush1.msra.mxu0 0.0
        %1118 = vmatprep.subr.mxu0 0.0
        %1119 = vmatpush1.msra.mxu0 0.0
        %1120 = vmatprep.subr.mxu0 0.0
        %1121 = vmatpush1.msra.mxu0 0.0
        %1122 = vmatprep.subr.mxu0 0.0
        %1123 = vmatpush1.msra.mxu0 0.0
        %1124 = vmatprep.subr.mxu0 0.0
        %1125 = vmatpush1.msra.mxu0 0.0
        %1126 = vmatprep.subr.mxu0 0.0
        %1127 = vmatpush1.msra.mxu0 0.0
        %1128 = vmatprep.subr.mxu0 0.0
        %1129 = vmatpush1.msra.mxu0 0.0
        %1130 = vmatprep.subr.mxu0 0.0
        %1131 = vmatpush1.msra.mxu0 0.0
        %1132 = vmatprep.subr.mxu0 0.0
        %1133 = vmatpush1.msra.mxu0 0.0
        %1134 = vmatprep.subr.mxu0 0.0
        %1135 = vmatpush1.msra.mxu0 0.0
        %1136 = vmatprep.subr.mxu0 0.0
        %1137 = vmatpush1.msra.mxu0 0.0
        %1138 = vmatprep.subr.mxu0 0.0
        %1139 = vmatpush1.msra.mxu0 0.0
        %1140 = vmatprep.subr.mxu0 0.0
        %1141 = vmatpush1.msra.mxu0 0.0
        %1142 = vmatprep.subr.mxu0 0.0
        %1143 = vmatpush1.msra.mxu0 0.0
        %1144 = vmatprep.subr.mxu0 0.0
        %1145 = vmatpush1.msra.mxu0 0.0
        %1146 = vmatprep.subr.mxu0 0.0
        %1147 = vmatpush1.msra.mxu0 0.0
        %1148 = vmatprep.subr.mxu0 0.0
        %1149 = vmatpush1.msra.mxu0 0.0
        %1150 = vmatprep.subr.mxu0 0.0
        %1151 = vmatpush1.msra.mxu0 0.0
        %1152 = vmatprep.subr.mxu0 0.0
        %1153 = vmatpush1.msra.mxu0 0.0
        %1154 = vmatprep.subr.mxu0 0.0
        %1155 = vmatpush1.msra.mxu0 0.0
        %1156 = vmatprep.subr.mxu0 0.0
        %1157 = vmatpush1.msra.mxu0 0.0
        %1158 = vmatprep.subr.mxu0 0.0
        %1159 = vmatpush1.msra.mxu0 0.0
        %1160 = vmatprep.subr.mxu0 0.0
        %1161 = vmatpush1.msra.mxu0 0.0
        %1162 = vmatprep.subr.mxu0 0.0
        %1163 = vmatpush1.msra.mxu0 0.0
        %1164 = vmatprep.subr.mxu0 0.0
        %1165 = vmatpush1.msra.mxu0 0.0
        %1166 = vmatprep.subr.mxu0 0.0
        %1167 = vmatpush1.msra.mxu0 0.0
        %1168 = vmatprep.mubr.f32.mxu0 0.0
        %1169 = vmatmul.mubr.f32.gmra.mrb[0].mxu0 %v1102
        %v1170 = vpop.f32.mrb[0].mxu0
        %v1171 = vadd.f32 0.0, %v1170
        %v1172 = vpop.f32.mrb[0].mxu0
        %1173 = vdwg.mxu0
        %v1174 = vrcp.pop %v1097
        %v1175 = vmul.f32 %v1171, %v1174
        %1177 = vrot.lane.b32.xlu0 %v1175, 16
        %v1178 = vpop.permute.xlu0 %1177
        %vm1180 = vcmask 162944
        %1181 = vst.msk [vmem:[#allocation2] sm:$0xff] %vm1180, %v1178
        %1182 = vrot.lane.b32.xlu0 %v326, 108
        %v1183 = vpop.permute.xlu0 %1182
        %1184 = vrot.lane.b32.xlu0 %v327, 108
        %v1185 = vpop.permute.xlu0 %1184
        %v1186 = vsel %vm329, %v1183, 0
        %v1188 = vsel %vm329, %v1185, 0
        %1190 = vmatprep.subr.mxu0 0.0
        %1191 = vmatpush1.xpose.msra.mxu0 %v1188
        %1192 = vmatprep.subr.mxu0 0.0
        %1193 = vmatpush1.xpose.msra.mxu0 0.0
        %1194 = vmatprep.subr.mxu0 0.0
        %1195 = vmatpush1.xpose.msra.mxu0 0.0
        %1196 = vmatprep.subr.mxu0 0.0
        %1197 = vmatpush1.xpose.msra.mxu0 0.0
        %1198 = vmatprep.subr.mxu0 0.0
        %1199 = vmatpush1.xpose.msra.mxu0 0.0
        %1200 = vmatprep.subr.mxu0 0.0
        %1201 = vmatpush1.xpose.msra.mxu0 0.0
        %1202 = vmatprep.subr.mxu0 0.0
        %1203 = vmatpush1.xpose.msra.mxu0 0.0
        %1204 = vmatprep.subr.mxu0 0.0
        %1205 = vmatpush1.xpose.msra.mxu0 0.0
        %1206 = vmatprep.subr.mxu0 0.0
        %1207 = vmatpush1.xpose.msra.mxu0 0.0
        %1208 = vmatprep.subr.mxu0 0.0
        %1209 = vmatpush1.xpose.msra.mxu0 0.0
        %1210 = vmatprep.subr.mxu0 0.0
        %1211 = vmatpush1.xpose.msra.mxu0 0.0
        %1212 = vmatprep.subr.mxu0 0.0
        %1213 = vmatpush1.xpose.msra.mxu0 0.0
        %1214 = vmatprep.subr.mxu0 0.0
        %1215 = vmatpush1.xpose.msra.mxu0 0.0
        %1216 = vmatprep.subr.mxu0 0.0
        %1217 = vmatpush1.xpose.msra.mxu0 0.0
        %1218 = vmatprep.subr.mxu0 0.0
        %1219 = vmatpush1.xpose.msra.mxu0 0.0
        %1220 = vmatprep.subr.mxu0 0.0
        %1221 = vmatpush1.xpose.msra.mxu0 0.0
        %1222 = vmatprep.subr.mxu0 0.0
        %1223 = vmatpush1.xpose.msra.mxu0 0.0
        %1224 = vmatprep.subr.mxu0 0.0
        %1225 = vmatpush1.xpose.msra.mxu0 0.0
        %1226 = vmatprep.subr.mxu0 0.0
        %1227 = vmatpush1.xpose.msra.mxu0 0.0
        %1228 = vmatprep.subr.mxu0 0.0
        %1229 = vmatpush1.xpose.msra.mxu0 0.0
        %1230 = vmatprep.subr.mxu0 0.0
        %1231 = vmatpush1.xpose.msra.mxu0 0.0
        %1232 = vmatprep.subr.mxu0 0.0
        %1233 = vmatpush1.xpose.msra.mxu0 0.0
        %1234 = vmatprep.subr.mxu0 0.0
        %1235 = vmatpush1.xpose.msra.mxu0 0.0
        %1236 = vmatprep.subr.mxu0 0.0
        %1237 = vmatpush1.xpose.msra.mxu0 0.0
        %1238 = vmatprep.subr.mxu0 0.0
        %1239 = vmatpush1.xpose.msra.mxu0 0.0
        %1240 = vmatprep.subr.mxu0 0.0
        %1241 = vmatpush1.xpose.msra.mxu0 0.0
        %1242 = vmatprep.subr.mxu0 0.0
        %1243 = vmatpush1.xpose.msra.mxu0 0.0
        %1244 = vmatprep.subr.mxu0 0.0
        %1245 = vmatpush1.xpose.msra.mxu0 0.0
        %1246 = vmatprep.subr.mxu0 0.0
        %1247 = vmatpush1.xpose.msra.mxu0 0.0
        %1248 = vmatprep.subr.mxu0 0.0
        %1249 = vmatpush1.xpose.msra.mxu0 0.0
        %1250 = vmatprep.subr.mxu0 0.0
        %1251 = vmatpush1.xpose.msra.mxu0 0.0
        %1252 = vmatprep.subr.mxu0 0.0
        %1253 = vmatpush1.xpose.msra.mxu0 0.0
        %1254 = vmatprep.mubr.f32.mxu0 0.0
        %1255 = vmatmul.mubr.f32.gmra.mrb[0].mxu0 %v1186
        %v1256 = vpop.f32.mrb[0].mxu0
        %v1257 = vadd.f32 0.0, %v1256
        %v1258 = vpop.f32.mrb[0].mxu0
        %1259 = vdwg.mxu0
        %v1260 = vmul.f32 %v1257, 0.5
        %v1261 = vsel %vm407, %v1260, -inf
        %1262 = vmax.xlane.f32.xlu0 %v1261
        %v1263 = vpop.xlane.xlu0 %1262
        %v1264 = vsub.f32 %v1260, %v1263
        %v1265 = vmul.f32 %v1264, 1.442695
        %v1266 = vpow.pop %v1265
        %v1267 = vsel %vm407, %v1266, 0.0
        %1268 = vadd.xlane.f32.xlu0 %v1267
        %v1269 = vpop.xlane.xlu0 %1268
        %1270 = vrot.lane.b32.xlu0 %v328, 108
        %v1271 = vpop.permute.xlu0 %1270
        %v1274 = vsel %vm407, %v1266, 0
        %1276 = vmatprep.subr.mxu0 0.0
        %1277 = vmatpush1.msra.mxu0 %v1271
        %1278 = vmatprep.subr.mxu0 0.0
        %1279 = vmatpush1.msra.mxu0 0.0
        %1280 = vmatprep.subr.mxu0 0.0
        %1281 = vmatpush1.msra.mxu0 0.0
        %1282 = vmatprep.subr.mxu0 0.0
        %1283 = vmatpush1.msra.mxu0 0.0
        %1284 = vmatprep.subr.mxu0 0.0
        %1285 = vmatpush1.msra.mxu0 0.0
        %1286 = vmatprep.subr.mxu0 0.0
        %1287 = vmatpush1.msra.mxu0 0.0
        %1288 = vmatprep.subr.mxu0 0.0
        %1289 = vmatpush1.msra.mxu0 0.0
        %1290 = vmatprep.subr.mxu0 0.0
        %1291 = vmatpush1.msra.mxu0 0.0
        %1292 = vmatprep.subr.mxu0 0.0
        %1293 = vmatpush1.msra.mxu0 0.0
        %1294 = vmatprep.subr.mxu0 0.0
        %1295 = vmatpush1.msra.mxu0 0.0
        %1296 = vmatprep.subr.mxu0 0.0
        %1297 = vmatpush1.msra.mxu0 0.0
        %1298 = vmatprep.subr.mxu0 0.0
        %1299 = vmatpush1.msra.mxu0 0.0
        %1300 = vmatprep.subr.mxu0 0.0
        %1301 = vmatpush1.msra.mxu0 0.0
        %1302 = vmatprep.subr.mxu0 0.0
        %1303 = vmatpush1.msra.mxu0 0.0
        %1304 = vmatprep.subr.mxu0 0.0
        %1305 = vmatpush1.msra.mxu0 0.0
        %1306 = vmatprep.subr.mxu0 0.0
        %1307 = vmatpush1.msra.mxu0 0.0
        %1308 = vmatprep.subr.mxu0 0.0
        %1309 = vmatpush1.msra.mxu0 0.0
        %1310 = vmatprep.subr.mxu0 0.0
        %1311 = vmatpush1.msra.mxu0 0.0
        %1312 = vmatprep.subr.mxu0 0.0
        %1313 = vmatpush1.msra.mxu0 0.0
        %1314 = vmatprep.subr.mxu0 0.0
        %1315 = vmatpush1.msra.mxu0 0.0
        %1316 = vmatprep.subr.mxu0 0.0
        %1317 = vmatpush1.msra.mxu0 0.0
        %1318 = vmatprep.subr.mxu0 0.0
        %1319 = vmatpush1.msra.mxu0 0.0
        %1320 = vmatprep.subr.mxu0 0.0
        %1321 = vmatpush1.msra.mxu0 0.0
        %1322 = vmatprep.subr.mxu0 0.0
        %1323 = vmatpush1.msra.mxu0 0.0
        %1324 = vmatprep.subr.mxu0 0.0
        %1325 = vmatpush1.msra.mxu0 0.0
        %1326 = vmatprep.subr.mxu0 0.0
        %1327 = vmatpush1.msra.mxu0 0.0
        %1328 = vmatprep.subr.mxu0 0.0
        %1329 = vmatpush1.msra.mxu0 0.0
        %1330 = vmatprep.subr.mxu0 0.0
        %1331 = vmatpush1.msra.mxu0 0.0
        %1332 = vmatprep.subr.mxu0 0.0
        %1333 = vmatpush1.msra.mxu0 0.0
        %1334 = vmatprep.subr.mxu0 0.0
        %1335 = vmatpush1.msra.mxu0 0.0
        %1336 = vmatprep.subr.mxu0 0.0
        %1337 = vmatpush1.msra.mxu0 0.0
        %1338 = vmatprep.subr.mxu0 0.0
        %1339 = vmatpush1.msra.mxu0 0.0
        %1340 = vmatprep.mubr.f32.mxu0 0.0
        %1341 = vmatmul.mubr.f32.gmra.mrb[0].mxu0 %v1274
        %v1342 = vpop.f32.mrb[0].mxu0
        %v1343 = vadd.f32 0.0, %v1342
        %v1344 = vpop.f32.mrb[0].mxu0
        %1345 = vdwg.mxu0
        %v1346 = vrcp.pop %v1269
        %v1347 = vmul.f32 %v1343, %v1346
        %1349 = vrot.lane.b32.xlu0 %v1347, 20
        %v1350 = vpop.permute.xlu0 %1349
        %vm1352 = vcmask 195744
        %1353 = vst.msk [vmem:[#allocation2] sm:$0xff] %vm1352, %v1350
        %1354 = vrot.lane.b32.xlu0 %v326, 104
        %v1355 = vpop.permute.xlu0 %1354
        %1356 = vrot.lane.b32.xlu0 %v327, 104
        %v1357 = vpop.permute.xlu0 %1356
        %v1358 = vsel %vm329, %v1355, 0
        %v1360 = vsel %vm329, %v1357, 0
        %1362 = vmatprep.subr.mxu0 0.0
        %1363 = vmatpush1.xpose.msra.mxu0 %v1360
        %1364 = vmatprep.subr.mxu0 0.0
        %1365 = vmatpush1.xpose.msra.mxu0 0.0
        %1366 = vmatprep.subr.mxu0 0.0
        %1367 = vmatpush1.xpose.msra.mxu0 0.0
        %1368 = vmatprep.subr.mxu0 0.0
        %1369 = vmatpush1.xpose.msra.mxu0 0.0
        %1370 = vmatprep.subr.mxu0 0.0
        %1371 = vmatpush1.xpose.msra.mxu0 0.0
        %1372 = vmatprep.subr.mxu0 0.0
        %1373 = vmatpush1.xpose.msra.mxu0 0.0
        %1374 = vmatprep.subr.mxu0 0.0
        %1375 = vmatpush1.xpose.msra.mxu0 0.0
        %1376 = vmatprep.subr.mxu0 0.0
        %1377 = vmatpush1.xpose.msra.mxu0 0.0
        %1378 = vmatprep.subr.mxu0 0.0
        %1379 = vmatpush1.xpose.msra.mxu0 0.0
        %1380 = vmatprep.subr.mxu0 0.0
        %1381 = vmatpush1.xpose.msra.mxu0 0.0
        %1382 = vmatprep.subr.mxu0 0.0
        %1383 = vmatpush1.xpose.msra.mxu0 0.0
        %1384 = vmatprep.subr.mxu0 0.0
        %1385 = vmatpush1.xpose.msra.mxu0 0.0
        %1386 = vmatprep.subr.mxu0 0.0
        %1387 = vmatpush1.xpose.msra.mxu0 0.0
        %1388 = vmatprep.subr.mxu0 0.0
        %1389 = vmatpush1.xpose.msra.mxu0 0.0
        %1390 = vmatprep.subr.mxu0 0.0
        %1391 = vmatpush1.xpose.msra.mxu0 0.0
        %1392 = vmatprep.subr.mxu0 0.0
        %1393 = vmatpush1.xpose.msra.mxu0 0.0
        %1394 = vmatprep.subr.mxu0 0.0
        %1395 = vmatpush1.xpose.msra.mxu0 0.0
        %1396 = vmatprep.subr.mxu0 0.0
        %1397 = vmatpush1.xpose.msra.mxu0 0.0
        %1398 = vmatprep.subr.mxu0 0.0
        %1399 = vmatpush1.xpose.msra.mxu0 0.0
        %1400 = vmatprep.subr.mxu0 0.0
        %1401 = vmatpush1.xpose.msra.mxu0 0.0
        %1402 = vmatprep.subr.mxu0 0.0
        %1403 = vmatpush1.xpose.msra.mxu0 0.0
        %1404 = vmatprep.subr.mxu0 0.0
        %1405 = vmatpush1.xpose.msra.mxu0 0.0
        %1406 = vmatprep.subr.mxu0 0.0
        %1407 = vmatpush1.xpose.msra.mxu0 0.0
        %1408 = vmatprep.subr.mxu0 0.0
        %1409 = vmatpush1.xpose.msra.mxu0 0.0
        %1410 = vmatprep.subr.mxu0 0.0
        %1411 = vmatpush1.xpose.msra.mxu0 0.0
        %1412 = vmatprep.subr.mxu0 0.0
        %1413 = vmatpush1.xpose.msra.mxu0 0.0
        %1414 = vmatprep.subr.mxu0 0.0
        %1415 = vmatpush1.xpose.msra.mxu0 0.0
        %1416 = vmatprep.subr.mxu0 0.0
        %1417 = vmatpush1.xpose.msra.mxu0 0.0
        %1418 = vmatprep.subr.mxu0 0.0
        %1419 = vmatpush1.xpose.msra.mxu0 0.0
        %1420 = vmatprep.subr.mxu0 0.0
        %1421 = vmatpush1.xpose.msra.mxu0 0.0
        %1422 = vmatprep.subr.mxu0 0.0
        %1423 = vmatpush1.xpose.msra.mxu0 0.0
        %1424 = vmatprep.subr.mxu0 0.0
        %1425 = vmatpush1.xpose.msra.mxu0 0.0
        %1426 = vmatprep.mubr.f32.mxu0 0.0
        %1427 = vmatmul.mubr.f32.gmra.mrb[0].mxu0 %v1358
        %v1428 = vpop.f32.mrb[0].mxu0
        %v1429 = vadd.f32 0.0, %v1428
        %v1430 = vpop.f32.mrb[0].mxu0
        %1431 = vdwg.mxu0
        %v1432 = vmul.f32 %v1429, 0.5
        %v1433 = vsel %vm407, %v1432, -inf
        %1434 = vmax.xlane.f32.xlu0 %v1433
        %v1435 = vpop.xlane.xlu0 %1434
        %v1436 = vsub.f32 %v1432, %v1435
        %v1437 = vmul.f32 %v1436, 1.442695
        %v1438 = vpow.pop %v1437
        %v1439 = vsel %vm407, %v1438, 0.0
        %1440 = vadd.xlane.f32.xlu0 %v1439
        %v1441 = vpop.xlane.xlu0 %1440
        %1442 = vrot.lane.b32.xlu0 %v328, 104
        %v1443 = vpop.permute.xlu0 %1442
        %v1446 = vsel %vm407, %v1438, 0
        %1448 = vmatprep.subr.mxu0 0.0
        %1449 = vmatpush1.msra.mxu0 %v1443
        %1450 = vmatprep.subr.mxu0 0.0
        %1451 = vmatpush1.msra.mxu0 0.0
        %1452 = vmatprep.subr.mxu0 0.0
        %1453 = vmatpush1.msra.mxu0 0.0
        %1454 = vmatprep.subr.mxu0 0.0
        %1455 = vmatpush1.msra.mxu0 0.0
        %1456 = vmatprep.subr.mxu0 0.0
        %1457 = vmatpush1.msra.mxu0 0.0
        %1458 = vmatprep.subr.mxu0 0.0
        %1459 = vmatpush1.msra.mxu0 0.0
        %1460 = vmatprep.subr.mxu0 0.0
        %1461 = vmatpush1.msra.mxu0 0.0
        %1462 = vmatprep.subr.mxu0 0.0
        %1463 = vmatpush1.msra.mxu0 0.0
        %1464 = vmatprep.subr.mxu0 0.0
        %1465 = vmatpush1.msra.mxu0 0.0
        %1466 = vmatprep.subr.mxu0 0.0
        %1467 = vmatpush1.msra.mxu0 0.0
        %1468 = vmatprep.subr.mxu0 0.0
        %1469 = vmatpush1.msra.mxu0 0.0
        %1470 = vmatprep.subr.mxu0 0.0
        %1471 = vmatpush1.msra.mxu0 0.0
        %1472 = vmatprep.subr.mxu0 0.0
        %1473 = vmatpush1.msra.mxu0 0.0
        %1474 = vmatprep.subr.mxu0 0.0
        %1475 = vmatpush1.msra.mxu0 0.0
        %1476 = vmatprep.subr.mxu0 0.0
        %1477 = vmatpush1.msra.mxu0 0.0
        %1478 = vmatprep.subr.mxu0 0.0
        %1479 = vmatpush1.msra.mxu0 0.0
        %1480 = vmatprep.subr.mxu0 0.0
        %1481 = vmatpush1.msra.mxu0 0.0
        %1482 = vmatprep.subr.mxu0 0.0
        %1483 = vmatpush1.msra.mxu0 0.0
        %1484 = vmatprep.subr.mxu0 0.0
        %1485 = vmatpush1.msra.mxu0 0.0
        %1486 = vmatprep.subr.mxu0 0.0
        %1487 = vmatpush1.msra.mxu0 0.0
        %1488 = vmatprep.subr.mxu0 0.0
        %1489 = vmatpush1.msra.mxu0 0.0
        %1490 = vmatprep.subr.mxu0 0.0
        %1491 = vmatpush1.msra.mxu0 0.0
        %1492 = vmatprep.subr.mxu0 0.0
        %1493 = vmatpush1.msra.mxu0 0.0
        %1494 = vmatprep.subr.mxu0 0.0
        %1495 = vmatpush1.msra.mxu0 0.0
        %1496 = vmatprep.subr.mxu0 0.0
        %1497 = vmatpush1.msra.mxu0 0.0
        %1498 = vmatprep.subr.mxu0 0.0
        %1499 = vmatpush1.msra.mxu0 0.0
        %1500 = vmatprep.subr.mxu0 0.0
        %1501 = vmatpush1.msra.mxu0 0.0
        %1502 = vmatprep.subr.mxu0 0.0
        %1503 = vmatpush1.msra.mxu0 0.0
        %1504 = vmatprep.subr.mxu0 0.0
        %1505 = vmatpush1.msra.mxu0 0.0
        %1506 = vmatprep.subr.mxu0 0.0
        %1507 = vmatpush1.msra.mxu0 0.0
        %1508 = vmatprep.subr.mxu0 0.0
        %1509 = vmatpush1.msra.mxu0 0.0
        %1510 = vmatprep.subr.mxu0 0.0
        %1511 = vmatpush1.msra.mxu0 0.0
        %1512 = vmatprep.mubr.f32.mxu0 0.0
        %1513 = vmatmul.mubr.f32.gmra.mrb[0].mxu0 %v1446
        %v1514 = vpop.f32.mrb[0].mxu0
        %v1515 = vadd.f32 0.0, %v1514
        %v1516 = vpop.f32.mrb[0].mxu0
        %1517 = vdwg.mxu0
        %v1518 = vrcp.pop %v1441
        %v1519 = vmul.f32 %v1515, %v1518
        %1521 = vrot.lane.b32.xlu0 %v1519, 24
        %v1522 = vpop.permute.xlu0 %1521
        %vm1524 = vcmask 228544
        %1525 = vst.msk [vmem:[#allocation2] sm:$0xff] %vm1524, %v1522
        %1526 = vrot.lane.b32.xlu0 %v326, 100
        %v1527 = vpop.permute.xlu0 %1526
        %1528 = vrot.lane.b32.xlu0 %v327, 100
        %v1529 = vpop.permute.xlu0 %1528
        %v1530 = vsel %vm329, %v1527, 0
        %v1532 = vsel %vm329, %v1529, 0
        %1534 = vmatprep.subr.mxu0 0.0
        %1535 = vmatpush1.xpose.msra.mxu0 %v1532
        %1536 = vmatprep.subr.mxu0 0.0
        %1537 = vmatpush1.xpose.msra.mxu0 0.0
        %1538 = vmatprep.subr.mxu0 0.0
        %1539 = vmatpush1.xpose.msra.mxu0 0.0
        %1540 = vmatprep.subr.mxu0 0.0
        %1541 = vmatpush1.xpose.msra.mxu0 0.0
        %1542 = vmatprep.subr.mxu0 0.0
        %1543 = vmatpush1.xpose.msra.mxu0 0.0
        %1544 = vmatprep.subr.mxu0 0.0
        %1545 = vmatpush1.xpose.msra.mxu0 0.0
        %1546 = vmatprep.subr.mxu0 0.0
        %1547 = vmatpush1.xpose.msra.mxu0 0.0
        %1548 = vmatprep.subr.mxu0 0.0
        %1549 = vmatpush1.xpose.msra.mxu0 0.0
        %1550 = vmatprep.subr.mxu0 0.0
        %1551 = vmatpush1.xpose.msra.mxu0 0.0
        %1552 = vmatprep.subr.mxu0 0.0
        %1553 = vmatpush1.xpose.msra.mxu0 0.0
        %1554 = vmatprep.subr.mxu0 0.0
        %1555 = vmatpush1.xpose.msra.mxu0 0.0
        %1556 = vmatprep.subr.mxu0 0.0
        %1557 = vmatpush1.xpose.msra.mxu0 0.0
        %1558 = vmatprep.subr.mxu0 0.0
        %1559 = vmatpush1.xpose.msra.mxu0 0.0
        %1560 = vmatprep.subr.mxu0 0.0
        %1561 = vmatpush1.xpose.msra.mxu0 0.0
        %1562 = vmatprep.subr.mxu0 0.0
        %1563 = vmatpush1.xpose.msra.mxu0 0.0
        %1564 = vmatprep.subr.mxu0 0.0
        %1565 = vmatpush1.xpose.msra.mxu0 0.0
        %1566 = vmatprep.subr.mxu0 0.0
        %1567 = vmatpush1.xpose.msra.mxu0 0.0
        %1568 = vmatprep.subr.mxu0 0.0
        %1569 = vmatpush1.xpose.msra.mxu0 0.0
        %1570 = vmatprep.subr.mxu0 0.0
        %1571 = vmatpush1.xpose.msra.mxu0 0.0
        %1572 = vmatprep.subr.mxu0 0.0
        %1573 = vmatpush1.xpose.msra.mxu0 0.0
        %1574 = vmatprep.subr.mxu0 0.0
        %1575 = vmatpush1.xpose.msra.mxu0 0.0
        %1576 = vmatprep.subr.mxu0 0.0
        %1577 = vmatpush1.xpose.msra.mxu0 0.0
        %1578 = vmatprep.subr.mxu0 0.0
        %1579 = vmatpush1.xpose.msra.mxu0 0.0
        %1580 = vmatprep.subr.mxu0 0.0
        %1581 = vmatpush1.xpose.msra.mxu0 0.0
        %1582 = vmatprep.subr.mxu0 0.0
        %1583 = vmatpush1.xpose.msra.mxu0 0.0
        %1584 = vmatprep.subr.mxu0 0.0
        %1585 = vmatpush1.xpose.msra.mxu0 0.0
        %1586 = vmatprep.subr.mxu0 0.0
        %1587 = vmatpush1.xpose.msra.mxu0 0.0
        %1588 = vmatprep.subr.mxu0 0.0
        %1589 = vmatpush1.xpose.msra.mxu0 0.0
        %1590 = vmatprep.subr.mxu0 0.0
        %1591 = vmatpush1.xpose.msra.mxu0 0.0
        %1592 = vmatprep.subr.mxu0 0.0
        %1593 = vmatpush1.xpose.msra.mxu0 0.0
        %1594 = vmatprep.subr.mxu0 0.0
        %1595 = vmatpush1.xpose.msra.mxu0 0.0
        %1596 = vmatprep.subr.mxu0 0.0
        %1597 = vmatpush1.xpose.msra.mxu0 0.0
        %1598 = vmatprep.mubr.f32.mxu0 0.0
        %1599 = vmatmul.mubr.f32.gmra.mrb[0].mxu0 %v1530
        %v1600 = vpop.f32.mrb[0].mxu0
        %v1601 = vadd.f32 0.0, %v1600
        %v1602 = vpop.f32.mrb[0].mxu0
        %1603 = vdwg.mxu0
        %v1604 = vmul.f32 %v1601, 0.5
        %v1605 = vsel %vm407, %v1604, -inf
        %1606 = vmax.xlane.f32.xlu0 %v1605
        %v1607 = vpop.xlane.xlu0 %1606
        %v1608 = vsub.f32 %v1604, %v1607
        %v1609 = vmul.f32 %v1608, 1.442695
        %v1610 = vpow.pop %v1609
        %v1611 = vsel %vm407, %v1610, 0.0
        %1612 = vadd.xlane.f32.xlu0 %v1611
        %v1613 = vpop.xlane.xlu0 %1612
        %1614 = vrot.lane.b32.xlu0 %v328, 100
        %v1615 = vpop.permute.xlu0 %1614
        %v1618 = vsel %vm407, %v1610, 0
        %1620 = vmatprep.subr.mxu0 0.0
        %1621 = vmatpush1.msra.mxu0 %v1615
        %1622 = vmatprep.subr.mxu0 0.0
        %1623 = vmatpush1.msra.mxu0 0.0
        %1624 = vmatprep.subr.mxu0 0.0
        %1625 = vmatpush1.msra.mxu0 0.0
        %1626 = vmatprep.subr.mxu0 0.0
        %1627 = vmatpush1.msra.mxu0 0.0
        %1628 = vmatprep.subr.mxu0 0.0
        %1629 = vmatpush1.msra.mxu0 0.0
        %1630 = vmatprep.subr.mxu0 0.0
        %1631 = vmatpush1.msra.mxu0 0.0
        %1632 = vmatprep.subr.mxu0 0.0
        %1633 = vmatpush1.msra.mxu0 0.0
        %1634 = vmatprep.subr.mxu0 0.0
        %1635 = vmatpush1.msra.mxu0 0.0
        %1636 = vmatprep.subr.mxu0 0.0
        %1637 = vmatpush1.msra.mxu0 0.0
        %1638 = vmatprep.subr.mxu0 0.0
        %1639 = vmatpush1.msra.mxu0 0.0
        %1640 = vmatprep.subr.mxu0 0.0
        %1641 = vmatpush1.msra.mxu0 0.0
        %1642 = vmatprep.subr.mxu0 0.0
        %1643 = vmatpush1.msra.mxu0 0.0
        %1644 = vmatprep.subr.mxu0 0.0
        %1645 = vmatpush1.msra.mxu0 0.0
        %1646 = vmatprep.subr.mxu0 0.0
        %1647 = vmatpush1.msra.mxu0 0.0
        %1648 = vmatprep.subr.mxu0 0.0
        %1649 = vmatpush1.msra.mxu0 0.0
        %1650 = vmatprep.subr.mxu0 0.0
        %1651 = vmatpush1.msra.mxu0 0.0
        %1652 = vmatprep.subr.mxu0 0.0
        %1653 = vmatpush1.msra.mxu0 0.0
        %1654 = vmatprep.subr.mxu0 0.0
        %1655 = vmatpush1.msra.mxu0 0.0
        %1656 = vmatprep.subr.mxu0 0.0
        %1657 = vmatpush1.msra.mxu0 0.0
        %1658 = vmatprep.subr.mxu0 0.0
        %1659 = vmatpush1.msra.mxu0 0.0
        %1660 = vmatprep.subr.mxu0 0.0
        %1661 = vmatpush1.msra.mxu0 0.0
        %1662 = vmatprep.subr.mxu0 0.0
        %1663 = vmatpush1.msra.mxu0 0.0
        %1664 = vmatprep.subr.mxu0 0.0
        %1665 = vmatpush1.msra.mxu0 0.0
        %1666 = vmatprep.subr.mxu0 0.0
        %1667 = vmatpush1.msra.mxu0 0.0
        %1668 = vmatprep.subr.mxu0 0.0
        %1669 = vmatpush1.msra.mxu0 0.0
        %1670 = vmatprep.subr.mxu0 0.0
        %1671 = vmatpush1.msra.mxu0 0.0
        %1672 = vmatprep.subr.mxu0 0.0
        %1673 = vmatpush1.msra.mxu0 0.0
        %1674 = vmatprep.subr.mxu0 0.0
        %1675 = vmatpush1.msra.mxu0 0.0
        %1676 = vmatprep.subr.mxu0 0.0
        %1677 = vmatpush1.msra.mxu0 0.0
        %1678 = vmatprep.subr.mxu0 0.0
        %1679 = vmatpush1.msra.mxu0 0.0
        %1680 = vmatprep.subr.mxu0 0.0
        %1681 = vmatpush1.msra.mxu0 0.0
        %1682 = vmatprep.subr.mxu0 0.0
        %1683 = vmatpush1.msra.mxu0 0.0
        %1684 = vmatprep.mubr.f32.mxu0 0.0
        %1685 = vmatmul.mubr.f32.gmra.mrb[0].mxu0 %v1618
        %v1686 = vpop.f32.mrb[0].mxu0
        %v1687 = vadd.f32 0.0, %v1686
        %v1688 = vpop.f32.mrb[0].mxu0
        %1689 = vdwg.mxu0
        %v1690 = vrcp.pop %v1613
        %v1691 = vmul.f32 %v1687, %v1690
        %1693 = vrot.lane.b32.xlu0 %v1691, 28
        %v1694 = vpop.permute.xlu0 %1693
        %vm1696 = vcmask 261344
        %1697 = vst.msk [vmem:[#allocation2] sm:$0xff] %vm1696, %v1694
        %v1698 = vld [vmem:[#allocation2] sm:$0xff]
        %v1699 = vld [vmem:[#allocation9] sm:$0xff]
        %v1700 = vld [vmem:[#allocation9 + $0x8] sm:$0xff]
        %v1701 = vld [vmem:[#allocation9 + $0x10] sm:$0xff]
        %v1702 = vld [vmem:[#allocation9 + $0x18] sm:$0xff]
        %v1703 = vld [vmem:[%s4] sm:$0x1]
        %v1705 = vlaneseq
        %v1706 = vshrl.u32 %v1705, 7
        %v1707 = vsub.s32 0, %v1706
        %v1708 = vrot.slane %v1703, %v1707
        %vm1710 = vcmask 261120
        %v1712 = vsel %vm1710, %v1698, 0
        %v1715 = vsel %vm1710, %v1699, 0
        %v1718 = vsel %vm1710, %v1700, 0
        %v1721 = vsel %vm1710, %v1701, 0
        %v1724 = vsel %vm1710, %v1702, 0
        %1726 = vmatprep.subr.mxu0 0.0
        %1727 = vmatpush1.xpose.msra.mxu0 %v1715
        %1728 = vmatprep.subr.mxu0 0.0
        %1729 = vmatpush1.xpose.msra.mxu0 %v1718
        %1730 = vmatprep.subr.mxu0 0.0
        %1731 = vmatpush1.xpose.msra.mxu0 %v1721
        %1732 = vmatprep.subr.mxu0 0.0
        %1733 = vmatpush1.xpose.msra.mxu0 %v1724
        %1734 = vmatprep.subr.mxu0 0.0
        %1735 = vmatpush1.xpose.msra.mxu0 0.0
        %1736 = vmatprep.subr.mxu0 0.0
        %1737 = vmatpush1.xpose.msra.mxu0 0.0
        %1738 = vmatprep.subr.mxu0 0.0
        %1739 = vmatpush1.xpose.msra.mxu0 0.0
        %1740 = vmatprep.subr.mxu0 0.0
        %1741 = vmatpush1.xpose.msra.mxu0 0.0
        %1742 = vmatprep.subr.mxu0 0.0
        %1743 = vmatpush1.xpose.msra.mxu0 0.0
        %1744 = vmatprep.subr.mxu0 0.0
        %1745 = vmatpush1.xpose.msra.mxu0 0.0
        %1746 = vmatprep.subr.mxu0 0.0
        %1747 = vmatpush1.xpose.msra.mxu0 0.0
        %1748 = vmatprep.subr.mxu0 0.0
        %1749 = vmatpush1.xpose.msra.mxu0 0.0
        %1750 = vmatprep.subr.mxu0 0.0
        %1751 = vmatpush1.xpose.msra.mxu0 0.0
        %1752 = vmatprep.subr.mxu0 0.0
        %1753 = vmatpush1.xpose.msra.mxu0 0.0
        %1754 = vmatprep.subr.mxu0 0.0
        %1755 = vmatpush1.xpose.msra.mxu0 0.0
        %1756 = vmatprep.subr.mxu0 0.0
        %1757 = vmatpush1.xpose.msra.mxu0 0.0
        %1758 = vmatprep.subr.mxu0 0.0
        %1759 = vmatpush1.xpose.msra.mxu0 0.0
        %1760 = vmatprep.subr.mxu0 0.0
        %1761 = vmatpush1.xpose.msra.mxu0 0.0
        %1762 = vmatprep.subr.mxu0 0.0
        %1763 = vmatpush1.xpose.msra.mxu0 0.0
        %1764 = vmatprep.subr.mxu0 0.0
        %1765 = vmatpush1.xpose.msra.mxu0 0.0
        %1766 = vmatprep.subr.mxu0 0.0
        %1767 = vmatpush1.xpose.msra.mxu0 0.0
        %1768 = vmatprep.subr.mxu0 0.0
        %1769 = vmatpush1.xpose.msra.mxu0 0.0
        %1770 = vmatprep.subr.mxu0 0.0
        %1771 = vmatpush1.xpose.msra.mxu0 0.0
        %1772 = vmatprep.subr.mxu0 0.0
        %1773 = vmatpush1.xpose.msra.mxu0 0.0
        %1774 = vmatprep.subr.mxu0 0.0
        %1775 = vmatpush1.xpose.msra.mxu0 0.0
        %1776 = vmatprep.subr.mxu0 0.0
        %1777 = vmatpush1.xpose.msra.mxu0 0.0
        %1778 = vmatprep.subr.mxu0 0.0
        %1779 = vmatpush1.xpose.msra.mxu0 0.0
        %1780 = vmatprep.subr.mxu0 0.0
        %1781 = vmatpush1.xpose.msra.mxu0 0.0
        %1782 = vmatprep.subr.mxu0 0.0
        %1783 = vmatpush1.xpose.msra.mxu0 0.0
        %1784 = vmatprep.subr.mxu0 0.0
        %1785 = vmatpush1.xpose.msra.mxu0 0.0
        %1786 = vmatprep.subr.mxu0 0.0
        %1787 = vmatpush1.xpose.msra.mxu0 0.0
        %1788 = vmatprep.subr.mxu0 0.0
        %1789 = vmatpush1.xpose.msra.mxu0 0.0
        %1790 = vmatprep.mubr.f32.mxu0 0.0
        %1791 = vmatmul.mubr.f32.gmra.mrb[0].mxu0 %v1712
        %v1792 = vpop.f32.mrb[0].mxu0
        %v1793 = vadd.f32 %v1708, %v1792
        %v1794 = vpop.f32.mrb[0].mxu0
        %1795 = vdwg.mxu0
        %1796 = vst.msk [vmem:[%s325] sm:$0xff] %vm1710, %v1793
        %s1797 = sand.u32 %s154, 1
        %s1798 = scalar_lea.sflag [#allocation5], %s1797
        %s1799 = sand.u32 %s154, 1
        %s1800 = smul.addr %s1799, 8
        %s1801 = scalar_lea.vmem [#allocation11], %s1800
        // Predicated region
        $region57: #{tpu_custom_call.1} parent=39 // pred_check
          %p1802 = pneg %p164
        $region58: #{tpu_custom_call.1} parent=39 // pred_check_branch
          %1804 = sbr.rel (%p1802) target = $region60
        $region59: #{tpu_custom_call.1} parent=39 // pred_region
          %s1806 = ssub.s32 128, 128
          %1807 = vsyncadd %s1798, %s1806
          %s1808 = smul.addr %s26, 128
          %s1809 = scalar_lea.hbm %s5, %s1808
          %s1811 = sshll.u32 %s1801, 4
          %s1812 = int_to_ptr.vmem [resolvable:$true] %s1811
          %1814 = dma.vmem_to_hbm [thread:$0]  %s1812, 128, %s1809, %s1798
        $region60: #{tpu_custom_call.1} parent=39 // pred_fallthru
          _
      $region40: #{tpu_custom_call.1} parent=5 // pred_fallthru
        _
      %p1815 = scmp.le.s32.totalorder 2, %s21
      // Predicated region
      $region61: #{tpu_custom_call.1} parent=5 // pred_check
        %p1816 = pneg %p1815
      $region62: #{tpu_custom_call.1} parent=5 // pred_check_branch
        %1818 = sbr.rel (%p1816) target = $region64
      $region63: #{tpu_custom_call.1} parent=5 // pred_region
        %s1819 = ssub.s32 %s21, 2
        // Predicated region
        $region65: #{tpu_custom_call.1} parent=63 // pred_check
          %p1820 = pneg %p170
        $region66: #{tpu_custom_call.1} parent=63 // pred_check_branch
          %1822 = sbr.rel (%p1820) target = $region68
        $region67: #{tpu_custom_call.1} parent=63 // pred_region
          %s1823 = sand.u32 %s155, 1
          %s1824 = scalar_lea.sflag [#allocation5], %s1823
          %s1825 = sand.u32 %s155, 1
          %s1826 = smul.addr %s1825, 8
          %s1827 = scalar_lea.vmem [#allocation11], %s1826
          %1828 = dma.done %s1824, 128
        $region68: #{tpu_custom_call.1} parent=63 // pred_fallthru
          _
      $region64: #{tpu_custom_call.1} parent=5 // pred_fallthru
        _
    $region6: #{tpu_custom_call.1} parent=1 // loop_footer
      %s25 = sadd.s32 1, %s21
    $region7: #{tpu_custom_call.1} parent=1 // loop_footer_branch
      %20 = sbr.rel target = $region3
    $region8: #{tpu_custom_call.1} parent=1 // loop_exit
      _
    %1829 = vsyncpa [#allocation4], 1
    %s1830 = scalar_lea.sflag [#allocation4], 1
    %1831 = vsyncpa %s1830, 1
    %1832 = vsyncpa [#allocation7], 1
    %s1833 = scalar_lea.sflag [#allocation7], 1
    %1834 = vsyncpa %s1833, 1
    %1835 = vsyncpa [#allocation10], 1
    %1836 = vsyncpa [#allocation5], 1
    %s1837 = scalar_lea.sflag [#allocation5], 1
    %1838 = vsyncpa %s1837, 1

</llo_original>
